<compile_context>
chip_gen: v5e
topology: v5e:2x2
jax: 0.10.0
libtpu: 0.0.40
codegen_flags: <defaults>
</compile_context>

<pallas_src>
import numpy as np
import jax
import jax.numpy as jnp
from jax.experimental import pallas as pl
from jax.experimental.pallas import tpu as pltpu


def _make_cnn_kernel(chans, W, CP, S_pad, range_out):
    """Builds the fused whole-network kernel (one batch element per grid step)."""
    Wp = W + 2
    OFFS = [oy * Wp + ox for oy in (-1, 0, 1) for ox in (-1, 0, 1)]
    # roll(x, s)[p] == x[p + off]  (jnp.roll semantics), so s = -off (mod S_pad)
    SHIFTS = [(-off) % S_pad for off in OFFS]
    n_layers = len(chans) - 1

    def kernel(x_ref, mask_ref, mask9_ref, p2_ref, *rest):
        param_refs = rest[:2 * n_layers]
        o_ref = rest[2 * n_layers]

        # Hoisted out of the per-layer loop (masks loaded once).
        mask = mask_ref[...]        # (1, S_pad): 1 on interior pixels, 0 on halo/pad
        mask9 = mask9_ref[...]      # mask / 9  (count_include_pad divisor folded in)

        x = x_ref[0]                # (CP, S_pad) f32, zero halo / zero padded rows

        for li in range(n_layers):
            cout = chans[li + 1]
            w_ref = param_refs[2 * li]        # (9, cout, CP) bf16, BN scale folded
            sh_ref = param_refs[2 * li + 1]   # (cout, 1)  f32 fused bias / BN shift

            # ---- 3x3 "SAME" conv: 9 accumulated MXU matmuls.  Each tap is an
            # XLU lane-roll of the zero-haloed activation, cast to bf16 for the
            # MXU; accumulation stays f32. ----
            acc = None
            for t, s in enumerate(SHIFTS):
                tap = x if s == 0 else pltpu.roll(x, s, axis=1)
                part = jnp.dot(w_ref[t], tap.astype(jnp.bfloat16),
                               preferred_element_type=jnp.float32)
                acc = part if acc is None else acc + part
            y = acc + sh_ref[...]                                   # (cout, S_pad)

            if li < n_layers - 1:
                # ---- ReLU, re-zero halo (required before pooling), then the
                # 3x3/s1 avg pool as 9 rolled VPU adds; mask9 applies the /9 and
                # re-zeros halo/pad so the next layer's taps see clean zeros. ----
                y = jnp.maximum(y, 0.0) * mask
                pooled = y
                for s in SHIFTS:
                    if s != 0:
                        pooled = pooled + pltpu.roll(y, s, axis=1)
                x = pooled * mask9
                if cout < CP:     # keep activations at CP (tile-aligned) rows
                    x = jnp.concatenate(
                        [x, jnp.zeros((CP - cout, S_pad), jnp.float32)], axis=0)
            else:
                # ---- final block: 2x2/s2 avg pool as a selection matmul into a
                # lane-dense (cout, 128) slab (p2's extra rows/cols are zero),
                # then tanh and an unmasked full-width store. ----
                pooled = jnp.dot(y.astype(jnp.bfloat16), p2_ref[...],
                                 preferred_element_type=jnp.float32)
                o_ref[0] = (range_out * jnp.tanh(pooled)).astype(o_ref.dtype)

    return kernel


def _make_interior_mask(H, W, S_pad):
    g = np.zeros((H + 2, W + 2), np.float32)
    g[1:H + 1, 1:W + 1] = 1.0
    m = np.zeros((1, S_pad), np.float32)
    m[0, :(H + 2) * (W + 2)] = g.reshape(-1)
    return jnp.asarray(m)                                  # (1, S_pad)


def _make_pool2x2_matrix(H, W, S_pad, PL):
    """Selection matrix for AvgPool2d(2) on the padded-flat layout, lane-padded."""
    Wp = W + 2
    Ho, Wo = H // 2, W // 2
    P = np.zeros((S_pad, PL), np.float32)
    for ho in range(Ho):
        for wo in range(Wo):
            o = ho * Wo + wo
            for dy in (0, 1):
                for dx in (0, 1):
                    q = (2 * ho + dy + 1) * Wp + (2 * wo + dx + 1)
                    P[q, o] = 0.25
    return jnp.asarray(P)                                  # (S_pad, PL)


def _prep_layer_params(layer, cin, cout, CP, is_bn, eps=1e-5):
    """Fold conv bias / eval-mode BN into per-tap bf16 weights + an f32 shift."""
    if is_bn:
        inv = layer['gamma'] / jnp.sqrt(layer['var'] + eps)
        scale = inv
        shift = (layer['b'] - layer['mean']) * inv + layer['beta']
    else:
        scale = jnp.ones_like(layer['b'])
        shift = layer['b']
    w9 = layer['w'].reshape(9, cin, cout)                  # HWIO -> (tap, ci, co)
    w9 = jnp.pad(w9, ((0, 0), (0, CP - cin), (0, 0)))      # (9, CP, co)
    w_taps = jnp.transpose(w9, (0, 2, 1)) * scale[None, :, None]   # (9, co, CP)
    return w_taps.astype(jnp.bfloat16), shift.reshape(cout, 1)


def init_params(key, conf):
    """Deterministic synthetic parameters (shapes from the PyTorch __init__)."""
    chans = [conf['in_channel']] + list(conf['hiddens']) + [conf['out_channel']]
    params = []
    for i in range(len(chans) - 1):
        cin, cout = chans[i], chans[i + 1]
        key, kw, kb, kg, kbe, km, kv = jax.random.split(key, 7)
        bound = 1.0 / np.sqrt(cin * 9)
        w_oihw = jax.random.uniform(kw, (cout, cin, 3, 3), jnp.float32, -bound, bound)
        layer = {
            'w': jnp.transpose(w_oihw, (2, 3, 1, 0)),      # OIHW -> HWIO
            'b': jax.random.uniform(kb, (cout,), jnp.float32, -bound, bound),
        }
        if conf['is_bn']:
            layer['gamma'] = 1.0 + 0.1 * jax.random.normal(kg, (cout,), jnp.float32)
            layer['beta'] = 0.1 * jax.random.normal(kbe, (cout,), jnp.float32)
            layer['mean'] = 0.1 * jax.random.normal(km, (cout,), jnp.float32)
            layer['var'] = jnp.abs(jax.random.normal(kv, (cout,), jnp.float32)) + 0.5
        params.append(layer)
    return params


def cnn_forward(params, spike, conf):
    """spike: (timestep, batch, 2, H, W) float32; returns NCHW like PyTorch."""
    assert conf['pool_type'] == 'avg'   # TODO(synk): max pool not implemented
    x = spike[:, :, 0] - spike[:, :, 1]                    # (T, B, H, W)
    x = jnp.transpose(x, (1, 0, 2, 3))                     # (B, T, H, W)  NCHW, C = T
    B, C0, H, W = x.shape
    S = (H + 2) * (W + 2)
    S_pad = ((S + 127) // 128) * 128                       # lane-dense spatial axis
    Ho, Wo = H // 2, W // 2
    P = Ho * Wo
    PL = max(128, ((P + 127) // 128) * 128)                # lane-dense pooled output

    chans = [conf['in_channel']] + list(conf['hiddens']) + [conf['out_channel']]
    n_layers = len(chans) - 1
    Cmax = max(chans[:-1])                                 # max conv-input channels
    CP = max(8, ((Cmax + 7) // 8) * 8)                     # sublane-aligned row count
    Cout = chans[-1]

    # Network input: channel rows padded to CP, zero spatial halo, flattened,
    # lane axis padded to S_pad.  All padding is zero (required by the kernel).
    xpad = jnp.pad(x, ((0, 0), (0, CP - C0), (1, 1), (1, 1))).reshape(B, CP, S)
    xpad = jnp.pad(xpad, ((0, 0), (0, 0), (0, S_pad - S)))

    mask = _make_interior_mask(H, W, S_pad)                # (1, S_pad) f32
    mask9 = mask * (1.0 / 9.0)
    p2 = _make_pool2x2_matrix(H, W, S_pad, PL).astype(jnp.bfloat16)

    flat_params = []
    in_specs = [
        pl.BlockSpec((1, CP, S_pad), lambda b: (b, 0, 0)),
        pl.BlockSpec((1, S_pad), lambda b: (0, 0)),
        pl.BlockSpec((1, S_pad), lambda b: (0, 0)),
        pl.BlockSpec((S_pad, PL), lambda b: (0, 0)),
    ]
    for li in range(n_layers):
        w_taps, shift = _prep_layer_params(params[li], chans[li], chans[li + 1],
                                           CP, conf['is_bn'])
        flat_params += [w_taps, shift]
        in_specs += [
            pl.BlockSpec(w_taps.shape, lambda b: (0, 0, 0)),
            pl.BlockSpec(shift.shape, lambda b: (0, 0)),
        ]

    # Advisory cost estimate so XLA can schedule the surrounding pads/reshapes.
    conv_flops = sum(2 * 9 * CP * chans[i + 1] * S_pad for i in range(n_layers))
    pool_flops = sum(9 * chans[i + 1] * S_pad for i in range(n_layers - 1))
    pool_flops += 2 * S_pad * PL * Cout
    param_bytes = sum(int(p.size) * p.dtype.itemsize for p in flat_params)
    cost = pl.CostEstimate(
        flops=int(B * (conv_flops + pool_flops)),
        transcendentals=int(B * Cout * PL),
        bytes_accessed=int(xpad.size * 4 + B * Cout * PL * 4
                           + 2 * mask.size * 4 + p2.size * 2 + param_bytes))

    kernel = _make_cnn_kernel(chans, W, CP, S_pad, float(conf['range_out']))
    out = pl.pallas_call(
        kernel,
        out_shape=jax.ShapeDtypeStruct((B, Cout, PL), jnp.float32),
        grid=(B,),
        in_specs=in_specs,
        out_specs=pl.BlockSpec((1, Cout, PL), lambda b: (b, 0, 0)),
        compiler_params=pltpu.CompilerParams(
            dimension_semantics=("parallel",)),            # v7x: batch over 2 TCs
        cost_estimate=cost,
    )(xpad, mask, mask9, p2, *flat_params)
    return out[:, :, :P].reshape(B, Cout, Ho, Wo)          # NCHW, like PyTorch


def cnn_reference(params, spike, conf):
    """Pure-JAX reference for correctness checking."""
    x = spike[:, :, 0] - spike[:, :, 1]
    x = jnp.transpose(x, (1, 0, 2, 3))
    x = jnp.transpose(x, (0, 2, 3, 1))  # NHWC

    def conv3x3(x, w, b):
        return jax.lax.conv_general_dilated(
            x, w, window_strides=(1, 1), padding='SAME',
            dimension_numbers=('NHWC', 'HWIO', 'NHWC')) + b

    def bn(x, layer, eps=1e-5):
        return ((x - layer['mean']) / jnp.sqrt(layer['var'] + eps)
                * layer['gamma'] + layer['beta'])

    def avgpool3(x):
        H, W = x.shape[1], x.shape[2]
        xp = jnp.pad(x, ((0, 0), (1, 1), (1, 1), (0, 0)))
        s = sum(xp[:, dy:dy + H, dx:dx + W, :]
                for dy in range(3) for dx in range(3))
        return s / 9.0

    def avgpool2(x):
        B, H, W, C = x.shape
        return x.reshape(B, H // 2, 2, W // 2, 2, C).mean(axis=(2, 4))

    for i in range(len(conf['hiddens'])):
        x = conv3x3(x, params[i]['w'], params[i]['b'])
        if conf['is_bn']:
            x = bn(x, params[i])
        x = jnp.maximum(x, 0.0)
        x = avgpool3(x)
    x = conv3x3(x, params[-1]['w'], params[-1]['b'])
    if conf['is_bn']:
        x = bn(x, params[-1])
    x = avgpool2(x)
    x = conf['range_out'] * jnp.tanh(x)
    return jnp.transpose(x, (0, 3, 1, 2))


if __name__ == "__main__":
    conf = {
        'in_size': 16,        # H = W = 16
        'in_channel': 4,      # == number of timesteps T
        'hiddens': [8],
        'out_channel': 4,
        'pool_type': 'avg',
        'is_bn': True,
        'range_out': 2.0,
    }
    key = jax.random.PRNGKey(0)
    kp, kx = jax.random.split(key)
    params = init_params(kp, conf)

    T, B, H = conf['in_channel'], 2, conf['in_size']
    spike = (jax.random.uniform(kx, (T, B, 2, H, H)) < 0.3).astype(jnp.float32)

    out = cnn_forward(params, spike, conf)
    out = jax.block_until_ready(out)

    assert out.shape == (B, conf['out_channel'], H // 2, H // 2), out.shape
    ref = cnn_reference(params, spike, conf)
    # Tolerance reflects bf16 MXU operand quantization (f32 accumulation); the
    # pure-f32 variant of this kernel matched the reference at 1e-3.
    np.testing.assert_allclose(np.asarray(out), np.asarray(ref),
                               rtol=2e-2, atol=2e-2)
    print("KERNEL_OK")
</pallas_src>

<mosaic_0001>
module attributes {stable_mosaic.version = 11 : i64} {
  func.func @kernel(%arg0: i32, %arg1: memref<1x8x384xf32, #tpu.memory_space<vmem>>, %arg2: memref<1x384xf32, #tpu.memory_space<vmem>>, %arg3: memref<1x384xf32, #tpu.memory_space<vmem>>, %arg4: memref<384x128xbf16, #tpu.memory_space<vmem>>, %arg5: memref<9x8x8xbf16, #tpu.memory_space<vmem>>, %arg6: memref<8x1xf32, #tpu.memory_space<vmem>>, %arg7: memref<9x4x8xbf16, #tpu.memory_space<vmem>>, %arg8: memref<4x1xf32, #tpu.memory_space<vmem>>, %arg9: memref<1x4x128xf32, #tpu.memory_space<vmem>>) attributes {dimension_semantics = [#tpu.dimension_semantics<parallel>], iteration_bounds = array<i64: 2>, scalar_prefetch = 0 : i64, scratch_operands = 0 : i64, tpu.core_type = #tpu.core_type<tc>, window_params = [{transform_indices = @transform_0, window_bounds = array<i64: 1, 8, 384>}, {pipeline_mode = #tpu.pipeline_mode<synchronous>, transform_indices = @transform_1, window_bounds = array<i64: 1, 384>}, {pipeline_mode = #tpu.pipeline_mode<synchronous>, transform_indices = @transform_2, window_bounds = array<i64: 1, 384>}, {pipeline_mode = #tpu.pipeline_mode<synchronous>, transform_indices = @transform_3, window_bounds = array<i64: 384, 128>}, {pipeline_mode = #tpu.pipeline_mode<synchronous>, transform_indices = @transform_4, window_bounds = array<i64: 9, 8, 8>}, {pipeline_mode = #tpu.pipeline_mode<synchronous>, transform_indices = @transform_5, window_bounds = array<i64: 8, 1>}, {pipeline_mode = #tpu.pipeline_mode<synchronous>, transform_indices = @transform_6, window_bounds = array<i64: 9, 4, 8>}, {pipeline_mode = #tpu.pipeline_mode<synchronous>, transform_indices = @transform_7, window_bounds = array<i64: 4, 1>}, {transform_indices = @transform_8, window_bounds = array<i64: 1, 4, 128>}]} {
    %c0 = arith.constant 0 : index
    %c0_0 = arith.constant 0 : index
    %0 = vector.load %arg2[%c0, %c0_0] : memref<1x384xf32, #tpu.memory_space<vmem>>, vector<1x384xf32>
    %c0_1 = arith.constant 0 : index
    %c0_2 = arith.constant 0 : index
    %1 = vector.load %arg3[%c0_1, %c0_2] : memref<1x384xf32, #tpu.memory_space<vmem>>, vector<1x384xf32>
    %c0_3 = arith.constant 0 : index
    %c0_4 = arith.constant 0 : index
    %c0_5 = arith.constant 0 : index
    %2 = vector.load %arg1[%c0_3, %c0_4, %c0_5] : memref<1x8x384xf32, #tpu.memory_space<vmem>>, vector<1x8x384xf32>
    %3 = vector.shape_cast %2 : vector<1x8x384xf32> to vector<8x384xf32>
    %c19_i32 = arith.constant 19 : i32
    %4 = tpu.dynamic_rotate %3 by %c19_i32 dim 1 : vector<8x384xf32>, i32 -> vector<8x384xf32>
    %c0_6 = arith.constant 0 : index
    %c0_7 = arith.constant 0 : index
    %c0_8 = arith.constant 0 : index
    %5 = vector.load %arg5[%c0_6, %c0_7, %c0_8] : memref<9x8x8xbf16, #tpu.memory_space<vmem>>, vector<1x8x8xbf16>
    %6 = vector.shape_cast %5 : vector<1x8x8xbf16> to vector<8x8xbf16>
    %7 = arith.truncf %4 : vector<8x384xf32> to vector<8x384xbf16>
    %cst = arith.constant dense<0.000000e+00> : vector<8x384xf32>
    %8 = tpu.matmul %6, %7, %cst {dimension_numbers = #tpu.dot_dimension_numbers<[1], [0], [0], [1], [0, 0, 1, 1], [], []>} : vector<8x8xbf16>, vector<8x384xbf16>, vector<8x384xf32> -> vector<8x384xf32>
    %c18_i32 = arith.constant 18 : i32
    %9 = tpu.dynamic_rotate %3 by %c18_i32 dim 1 : vector<8x384xf32>, i32 -> vector<8x384xf32>
    %c1 = arith.constant 1 : index
    %c0_9 = arith.constant 0 : index
    %c0_10 = arith.constant 0 : index
    %10 = vector.load %arg5[%c1, %c0_9, %c0_10] : memref<9x8x8xbf16, #tpu.memory_space<vmem>>, vector<1x8x8xbf16>
    %11 = vector.shape_cast %10 : vector<1x8x8xbf16> to vector<8x8xbf16>
    %12 = arith.truncf %9 : vector<8x384xf32> to vector<8x384xbf16>
    %cst_11 = arith.constant dense<0.000000e+00> : vector<8x384xf32>
    %13 = tpu.matmul %11, %12, %cst_11 {dimension_numbers = #tpu.dot_dimension_numbers<[1], [0], [0], [1], [0, 0, 1, 1], [], []>} : vector<8x8xbf16>, vector<8x384xbf16>, vector<8x384xf32> -> vector<8x384xf32>
    %14 = arith.addf %8, %13 : vector<8x384xf32>
    %c17_i32 = arith.constant 17 : i32
    %15 = tpu.dynamic_rotate %3 by %c17_i32 dim 1 : vector<8x384xf32>, i32 -> vector<8x384xf32>
    %c2 = arith.constant 2 : index
    %c0_12 = arith.constant 0 : index
    %c0_13 = arith.constant 0 : index
    %16 = vector.load %arg5[%c2, %c0_12, %c0_13] : memref<9x8x8xbf16, #tpu.memory_space<vmem>>, vector<1x8x8xbf16>
    %17 = vector.shape_cast %16 : vector<1x8x8xbf16> to vector<8x8xbf16>
    %18 = arith.truncf %15 : vector<8x384xf32> to vector<8x384xbf16>
    %cst_14 = arith.constant dense<0.000000e+00> : vector<8x384xf32>
    %19 = tpu.matmul %17, %18, %cst_14 {dimension_numbers = #tpu.dot_dimension_numbers<[1], [0], [0], [1], [0, 0, 1, 1], [], []>} : vector<8x8xbf16>, vector<8x384xbf16>, vector<8x384xf32> -> vector<8x384xf32>
    %20 = arith.addf %14, %19 : vector<8x384xf32>
    %c1_i32 = arith.constant 1 : i32
    %21 = tpu.dynamic_rotate %3 by %c1_i32 dim 1 : vector<8x384xf32>, i32 -> vector<8x384xf32>
    %c3 = arith.constant 3 : index
    %c0_15 = arith.constant 0 : index
    %c0_16 = arith.constant 0 : index
    %22 = vector.load %arg5[%c3, %c0_15, %c0_16] : memref<9x8x8xbf16, #tpu.memory_space<vmem>>, vector<1x8x8xbf16>
    %23 = vector.shape_cast %22 : vector<1x8x8xbf16> to vector<8x8xbf16>
    %24 = arith.truncf %21 : vector<8x384xf32> to vector<8x384xbf16>
    %cst_17 = arith.constant dense<0.000000e+00> : vector<8x384xf32>
    %25 = tpu.matmul %23, %24, %cst_17 {dimension_numbers = #tpu.dot_dimension_numbers<[1], [0], [0], [1], [0, 0, 1, 1], [], []>} : vector<8x8xbf16>, vector<8x384xbf16>, vector<8x384xf32> -> vector<8x384xf32>
    %26 = arith.addf %20, %25 : vector<8x384xf32>
    %c4 = arith.constant 4 : index
    %c0_18 = arith.constant 0 : index
    %c0_19 = arith.constant 0 : index
    %27 = vector.load %arg5[%c4, %c0_18, %c0_19] : memref<9x8x8xbf16, #tpu.memory_space<vmem>>, vector<1x8x8xbf16>
    %28 = vector.shape_cast %27 : vector<1x8x8xbf16> to vector<8x8xbf16>
    %29 = arith.truncf %3 : vector<8x384xf32> to vector<8x384xbf16>
    %cst_20 = arith.constant dense<0.000000e+00> : vector<8x384xf32>
    %30 = tpu.matmul %28, %29, %cst_20 {dimension_numbers = #tpu.dot_dimension_numbers<[1], [0], [0], [1], [0, 0, 1, 1], [], []>} : vector<8x8xbf16>, vector<8x384xbf16>, vector<8x384xf32> -> vector<8x384xf32>
    %31 = arith.addf %26, %30 : vector<8x384xf32>
    %c383_i32 = arith.constant 383 : i32
    %32 = tpu.dynamic_rotate %3 by %c383_i32 dim 1 : vector<8x384xf32>, i32 -> vector<8x384xf32>
    %c5 = arith.constant 5 : index
    %c0_21 = arith.constant 0 : index
    %c0_22 = arith.constant 0 : index
    %33 = vector.load %arg5[%c5, %c0_21, %c0_22] : memref<9x8x8xbf16, #tpu.memory_space<vmem>>, vector<1x8x8xbf16>
    %34 = vector.shape_cast %33 : vector<1x8x8xbf16> to vector<8x8xbf16>
    %35 = arith.truncf %32 : vector<8x384xf32> to vector<8x384xbf16>
    %cst_23 = arith.constant dense<0.000000e+00> : vector<8x384xf32>
    %36 = tpu.matmul %34, %35, %cst_23 {dimension_numbers = #tpu.dot_dimension_numbers<[1], [0], [0], [1], [0, 0, 1, 1], [], []>} : vector<8x8xbf16>, vector<8x384xbf16>, vector<8x384xf32> -> vector<8x384xf32>
    %37 = arith.addf %31, %36 : vector<8x384xf32>
    %c367_i32 = arith.constant 367 : i32
    %38 = tpu.dynamic_rotate %3 by %c367_i32 dim 1 : vector<8x384xf32>, i32 -> vector<8x384xf32>
    %c6 = arith.constant 6 : index
    %c0_24 = arith.constant 0 : index
    %c0_25 = arith.constant 0 : index
    %39 = vector.load %arg5[%c6, %c0_24, %c0_25] : memref<9x8x8xbf16, #tpu.memory_space<vmem>>, vector<1x8x8xbf16>
    %40 = vector.shape_cast %39 : vector<1x8x8xbf16> to vector<8x8xbf16>
    %41 = arith.truncf %38 : vector<8x384xf32> to vector<8x384xbf16>
    %cst_26 = arith.constant dense<0.000000e+00> : vector<8x384xf32>
    %42 = tpu.matmul %40, %41, %cst_26 {dimension_numbers = #tpu.dot_dimension_numbers<[1], [0], [0], [1], [0, 0, 1, 1], [], []>} : vector<8x8xbf16>, vector<8x384xbf16>, vector<8x384xf32> -> vector<8x384xf32>
    %43 = arith.addf %37, %42 : vector<8x384xf32>
    %c366_i32 = arith.constant 366 : i32
    %44 = tpu.dynamic_rotate %3 by %c366_i32 dim 1 : vector<8x384xf32>, i32 -> vector<8x384xf32>
    %c7 = arith.constant 7 : index
    %c0_27 = arith.constant 0 : index
    %c0_28 = arith.constant 0 : index
    %45 = vector.load %arg5[%c7, %c0_27, %c0_28] : memref<9x8x8xbf16, #tpu.memory_space<vmem>>, vector<1x8x8xbf16>
    %46 = vector.shape_cast %45 : vector<1x8x8xbf16> to vector<8x8xbf16>
    %47 = arith.truncf %44 : vector<8x384xf32> to vector<8x384xbf16>
    %cst_29 = arith.constant dense<0.000000e+00> : vector<8x384xf32>
    %48 = tpu.matmul %46, %47, %cst_29 {dimension_numbers = #tpu.dot_dimension_numbers<[1], [0], [0], [1], [0, 0, 1, 1], [], []>} : vector<8x8xbf16>, vector<8x384xbf16>, vector<8x384xf32> -> vector<8x384xf32>
    %49 = arith.addf %43, %48 : vector<8x384xf32>
    %c365_i32 = arith.constant 365 : i32
    %50 = tpu.dynamic_rotate %3 by %c365_i32 dim 1 : vector<8x384xf32>, i32 -> vector<8x384xf32>
    %c8 = arith.constant 8 : index
    %c0_30 = arith.constant 0 : index
    %c0_31 = arith.constant 0 : index
    %51 = vector.load %arg5[%c8, %c0_30, %c0_31] : memref<9x8x8xbf16, #tpu.memory_space<vmem>>, vector<1x8x8xbf16>
    %52 = vector.shape_cast %51 : vector<1x8x8xbf16> to vector<8x8xbf16>
    %53 = arith.truncf %50 : vector<8x384xf32> to vector<8x384xbf16>
    %cst_32 = arith.constant dense<0.000000e+00> : vector<8x384xf32>
    %54 = tpu.matmul %52, %53, %cst_32 {dimension_numbers = #tpu.dot_dimension_numbers<[1], [0], [0], [1], [0, 0, 1, 1], [], []>} : vector<8x8xbf16>, vector<8x384xbf16>, vector<8x384xf32> -> vector<8x384xf32>
    %55 = arith.addf %49, %54 : vector<8x384xf32>
    %c0_33 = arith.constant 0 : index
    %c0_34 = arith.constant 0 : index
    %56 = vector.load %arg6[%c0_33, %c0_34] : memref<8x1xf32, #tpu.memory_space<vmem>>, vector<8x1xf32>
    %57 = vector.broadcast %56 : vector<8x1xf32> to vector<8x384xf32>
    %58 = arith.addf %55, %57 : vector<8x384xf32>
    %cst_35 = arith.constant 0.000000e+00 : f32
    %59 = vector.broadcast %cst_35 : f32 to vector<8x384xf32>
    %60 = arith.maximumf %58, %59 : vector<8x384xf32>
    %61 = vector.broadcast %0 : vector<1x384xf32> to vector<8x384xf32>
    %62 = arith.mulf %60, %61 : vector<8x384xf32>
    %c19_i32_36 = arith.constant 19 : i32
    %63 = tpu.dynamic_rotate %62 by %c19_i32_36 dim 1 : vector<8x384xf32>, i32 -> vector<8x384xf32>
    %64 = arith.addf %62, %63 : vector<8x384xf32>
    %c18_i32_37 = arith.constant 18 : i32
    %65 = tpu.dynamic_rotate %62 by %c18_i32_37 dim 1 : vector<8x384xf32>, i32 -> vector<8x384xf32>
    %66 = arith.addf %64, %65 : vector<8x384xf32>
    %c17_i32_38 = arith.constant 17 : i32
    %67 = tpu.dynamic_rotate %62 by %c17_i32_38 dim 1 : vector<8x384xf32>, i32 -> vector<8x384xf32>
    %68 = arith.addf %66, %67 : vector<8x384xf32>
    %c1_i32_39 = arith.constant 1 : i32
    %69 = tpu.dynamic_rotate %62 by %c1_i32_39 dim 1 : vector<8x384xf32>, i32 -> vector<8x384xf32>
    %70 = arith.addf %68, %69 : vector<8x384xf32>
    %c383_i32_40 = arith.constant 383 : i32
    %71 = tpu.dynamic_rotate %62 by %c383_i32_40 dim 1 : vector<8x384xf32>, i32 -> vector<8x384xf32>
    %72 = arith.addf %70, %71 : vector<8x384xf32>
    %c367_i32_41 = arith.constant 367 : i32
    %73 = tpu.dynamic_rotate %62 by %c367_i32_41 dim 1 : vector<8x384xf32>, i32 -> vector<8x384xf32>
    %74 = arith.addf %72, %73 : vector<8x384xf32>
    %c366_i32_42 = arith.constant 366 : i32
    %75 = tpu.dynamic_rotate %62 by %c366_i32_42 dim 1 : vector<8x384xf32>, i32 -> vector<8x384xf32>
    %76 = arith.addf %74, %75 : vector<8x384xf32>
    %c365_i32_43 = arith.constant 365 : i32
    %77 = tpu.dynamic_rotate %62 by %c365_i32_43 dim 1 : vector<8x384xf32>, i32 -> vector<8x384xf32>
    %78 = arith.addf %76, %77 : vector<8x384xf32>
    %79 = vector.broadcast %1 : vector<1x384xf32> to vector<8x384xf32>
    %80 = arith.mulf %78, %79 : vector<8x384xf32>
    %c19_i32_44 = arith.constant 19 : i32
    %81 = tpu.dynamic_rotate %80 by %c19_i32_44 dim 1 : vector<8x384xf32>, i32 -> vector<8x384xf32>
    %c0_45 = arith.constant 0 : index
    %c0_46 = arith.constant 0 : index
    %c0_47 = arith.constant 0 : index
    %82 = vector.load %arg7[%c0_45, %c0_46, %c0_47] : memref<9x4x8xbf16, #tpu.memory_space<vmem>>, vector<1x4x8xbf16>
    %83 = vector.shape_cast %82 : vector<1x4x8xbf16> to vector<4x8xbf16>
    %84 = arith.truncf %81 : vector<8x384xf32> to vector<8x384xbf16>
    %cst_48 = arith.constant dense<0.000000e+00> : vector<4x384xf32>
    %85 = tpu.matmul %83, %84, %cst_48 {dimension_numbers = #tpu.dot_dimension_numbers<[1], [0], [0], [1], [0, 0, 1, 1], [], []>} : vector<4x8xbf16>, vector<8x384xbf16>, vector<4x384xf32> -> vector<4x384xf32>
    %c18_i32_49 = arith.constant 18 : i32
    %86 = tpu.dynamic_rotate %80 by %c18_i32_49 dim 1 : vector<8x384xf32>, i32 -> vector<8x384xf32>
    %c1_50 = arith.constant 1 : index
    %c0_51 = arith.constant 0 : index
    %c0_52 = arith.constant 0 : index
    %87 = vector.load %arg7[%c1_50, %c0_51, %c0_52] : memref<9x4x8xbf16, #tpu.memory_space<vmem>>, vector<1x4x8xbf16>
    %88 = vector.shape_cast %87 : vector<1x4x8xbf16> to vector<4x8xbf16>
    %89 = arith.truncf %86 : vector<8x384xf32> to vector<8x384xbf16>
    %cst_53 = arith.constant dense<0.000000e+00> : vector<4x384xf32>
    %90 = tpu.matmul %88, %89, %cst_53 {dimension_numbers = #tpu.dot_dimension_numbers<[1], [0], [0], [1], [0, 0, 1, 1], [], []>} : vector<4x8xbf16>, vector<8x384xbf16>, vector<4x384xf32> -> vector<4x384xf32>
    %91 = arith.addf %85, %90 : vector<4x384xf32>
    %c17_i32_54 = arith.constant 17 : i32
    %92 = tpu.dynamic_rotate %80 by %c17_i32_54 dim 1 : vector<8x384xf32>, i32 -> vector<8x384xf32>
    %c2_55 = arith.constant 2 : index
    %c0_56 = arith.constant 0 : index
    %c0_57 = arith.constant 0 : index
    %93 = vector.load %arg7[%c2_55, %c0_56, %c0_57] : memref<9x4x8xbf16, #tpu.memory_space<vmem>>, vector<1x4x8xbf16>
    %94 = vector.shape_cast %93 : vector<1x4x8xbf16> to vector<4x8xbf16>
    %95 = arith.truncf %92 : vector<8x384xf32> to vector<8x384xbf16>
    %cst_58 = arith.constant dense<0.000000e+00> : vector<4x384xf32>
    %96 = tpu.matmul %94, %95, %cst_58 {dimension_numbers = #tpu.dot_dimension_numbers<[1], [0], [0], [1], [0, 0, 1, 1], [], []>} : vector<4x8xbf16>, vector<8x384xbf16>, vector<4x384xf32> -> vector<4x384xf32>
    %97 = arith.addf %91, %96 : vector<4x384xf32>
    %c1_i32_59 = arith.constant 1 : i32
    %98 = tpu.dynamic_rotate %80 by %c1_i32_59 dim 1 : vector<8x384xf32>, i32 -> vector<8x384xf32>
    %c3_60 = arith.constant 3 : index
    %c0_61 = arith.constant 0 : index
    %c0_62 = arith.constant 0 : index
    %99 = vector.load %arg7[%c3_60, %c0_61, %c0_62] : memref<9x4x8xbf16, #tpu.memory_space<vmem>>, vector<1x4x8xbf16>
    %100 = vector.shape_cast %99 : vector<1x4x8xbf16> to vector<4x8xbf16>
    %101 = arith.truncf %98 : vector<8x384xf32> to vector<8x384xbf16>
    %cst_63 = arith.constant dense<0.000000e+00> : vector<4x384xf32>
    %102 = tpu.matmul %100, %101, %cst_63 {dimension_numbers = #tpu.dot_dimension_numbers<[1], [0], [0], [1], [0, 0, 1, 1], [], []>} : vector<4x8xbf16>, vector<8x384xbf16>, vector<4x384xf32> -> vector<4x384xf32>
    %103 = arith.addf %97, %102 : vector<4x384xf32>
    %c4_64 = arith.constant 4 : index
    %c0_65 = arith.constant 0 : index
    %c0_66 = arith.constant 0 : index
    %104 = vector.load %arg7[%c4_64, %c0_65, %c0_66] : memref<9x4x8xbf16, #tpu.memory_space<vmem>>, vector<1x4x8xbf16>
    %105 = vector.shape_cast %104 : vector<1x4x8xbf16> to vector<4x8xbf16>
    %106 = arith.truncf %80 : vector<8x384xf32> to vector<8x384xbf16>
    %cst_67 = arith.constant dense<0.000000e+00> : vector<4x384xf32>
    %107 = tpu.matmul %105, %106, %cst_67 {dimension_numbers = #tpu.dot_dimension_numbers<[1], [0], [0], [1], [0, 0, 1, 1], [], []>} : vector<4x8xbf16>, vector<8x384xbf16>, vector<4x384xf32> -> vector<4x384xf32>
    %108 = arith.addf %103, %107 : vector<4x384xf32>
    %c383_i32_68 = arith.constant 383 : i32
    %109 = tpu.dynamic_rotate %80 by %c383_i32_68 dim 1 : vector<8x384xf32>, i32 -> vector<8x384xf32>
    %c5_69 = arith.constant 5 : index
    %c0_70 = arith.constant 0 : index
    %c0_71 = arith.constant 0 : index
    %110 = vector.load %arg7[%c5_69, %c0_70, %c0_71] : memref<9x4x8xbf16, #tpu.memory_space<vmem>>, vector<1x4x8xbf16>
    %111 = vector.shape_cast %110 : vector<1x4x8xbf16> to vector<4x8xbf16>
    %112 = arith.truncf %109 : vector<8x384xf32> to vector<8x384xbf16>
    %cst_72 = arith.constant dense<0.000000e+00> : vector<4x384xf32>
    %113 = tpu.matmul %111, %112, %cst_72 {dimension_numbers = #tpu.dot_dimension_numbers<[1], [0], [0], [1], [0, 0, 1, 1], [], []>} : vector<4x8xbf16>, vector<8x384xbf16>, vector<4x384xf32> -> vector<4x384xf32>
    %114 = arith.addf %108, %113 : vector<4x384xf32>
    %c367_i32_73 = arith.constant 367 : i32
    %115 = tpu.dynamic_rotate %80 by %c367_i32_73 dim 1 : vector<8x384xf32>, i32 -> vector<8x384xf32>
    %c6_74 = arith.constant 6 : index
    %c0_75 = arith.constant 0 : index
    %c0_76 = arith.constant 0 : index
    %116 = vector.load %arg7[%c6_74, %c0_75, %c0_76] : memref<9x4x8xbf16, #tpu.memory_space<vmem>>, vector<1x4x8xbf16>
    %117 = vector.shape_cast %116 : vector<1x4x8xbf16> to vector<4x8xbf16>
    %118 = arith.truncf %115 : vector<8x384xf32> to vector<8x384xbf16>
    %cst_77 = arith.constant dense<0.000000e+00> : vector<4x384xf32>
    %119 = tpu.matmul %117, %118, %cst_77 {dimension_numbers = #tpu.dot_dimension_numbers<[1], [0], [0], [1], [0, 0, 1, 1], [], []>} : vector<4x8xbf16>, vector<8x384xbf16>, vector<4x384xf32> -> vector<4x384xf32>
    %120 = arith.addf %114, %119 : vector<4x384xf32>
    %c366_i32_78 = arith.constant 366 : i32
    %121 = tpu.dynamic_rotate %80 by %c366_i32_78 dim 1 : vector<8x384xf32>, i32 -> vector<8x384xf32>
    %c7_79 = arith.constant 7 : index
    %c0_80 = arith.constant 0 : index
    %c0_81 = arith.constant 0 : index
    %122 = vector.load %arg7[%c7_79, %c0_80, %c0_81] : memref<9x4x8xbf16, #tpu.memory_space<vmem>>, vector<1x4x8xbf16>
    %123 = vector.shape_cast %122 : vector<1x4x8xbf16> to vector<4x8xbf16>
    %124 = arith.truncf %121 : vector<8x384xf32> to vector<8x384xbf16>
    %cst_82 = arith.constant dense<0.000000e+00> : vector<4x384xf32>
    %125 = tpu.matmul %123, %124, %cst_82 {dimension_numbers = #tpu.dot_dimension_numbers<[1], [0], [0], [1], [0, 0, 1, 1], [], []>} : vector<4x8xbf16>, vector<8x384xbf16>, vector<4x384xf32> -> vector<4x384xf32>
    %126 = arith.addf %120, %125 : vector<4x384xf32>
    %c365_i32_83 = arith.constant 365 : i32
    %127 = tpu.dynamic_rotate %80 by %c365_i32_83 dim 1 : vector<8x384xf32>, i32 -> vector<8x384xf32>
    %c8_84 = arith.constant 8 : index
    %c0_85 = arith.constant 0 : index
    %c0_86 = arith.constant 0 : index
    %128 = vector.load %arg7[%c8_84, %c0_85, %c0_86] : memref<9x4x8xbf16, #tpu.memory_space<vmem>>, vector<1x4x8xbf16>
    %129 = vector.shape_cast %128 : vector<1x4x8xbf16> to vector<4x8xbf16>
    %130 = arith.truncf %127 : vector<8x384xf32> to vector<8x384xbf16>
    %cst_87 = arith.constant dense<0.000000e+00> : vector<4x384xf32>
    %131 = tpu.matmul %129, %130, %cst_87 {dimension_numbers = #tpu.dot_dimension_numbers<[1], [0], [0], [1], [0, 0, 1, 1], [], []>} : vector<4x8xbf16>, vector<8x384xbf16>, vector<4x384xf32> -> vector<4x384xf32>
    %132 = arith.addf %126, %131 : vector<4x384xf32>
    %c0_88 = arith.constant 0 : index
    %c0_89 = arith.constant 0 : index
    %133 = vector.load %arg8[%c0_88, %c0_89] : memref<4x1xf32, #tpu.memory_space<vmem>>, vector<4x1xf32>
    %134 = vector.broadcast %133 : vector<4x1xf32> to vector<4x384xf32>
    %135 = arith.addf %132, %134 : vector<4x384xf32>
    %136 = arith.truncf %135 : vector<4x384xf32> to vector<4x384xbf16>
    %c0_90 = arith.constant 0 : index
    %c0_91 = arith.constant 0 : index
    %137 = vector.load %arg4[%c0_90, %c0_91] : memref<384x128xbf16, #tpu.memory_space<vmem>>, vector<384x128xbf16>
    %cst_92 = arith.constant dense<0.000000e+00> : vector<4x128xf32>
    %138 = tpu.matmul %136, %137, %cst_92 {dimension_numbers = #tpu.dot_dimension_numbers<[1], [0], [0], [1], [0, 0, 1, 1], [], []>} : vector<4x384xbf16>, vector<384x128xbf16>, vector<4x128xf32> -> vector<4x128xf32>
    %139 = math.tanh %138 : vector<4x128xf32>
    %cst_93 = arith.constant 2.000000e+00 : f32
    %140 = vector.broadcast %cst_93 : f32 to vector<4x128xf32>
    %141 = arith.mulf %140, %139 : vector<4x128xf32>
    %c0_94 = arith.constant 0 : index
    %c0_95 = arith.constant 0 : index
    %c0_96 = arith.constant 0 : index
    %142 = vector.load %arg9[%c0_94, %c0_95, %c0_96] : memref<1x4x128xf32, #tpu.memory_space<vmem>>, vector<1x4x128xf32>
    %143 = vector.shape_cast %142 : vector<1x4x128xf32> to vector<4x128xf32>
    %144 = vector.shape_cast %141 : vector<4x128xf32> to vector<1x4x128xf32>
    tpu.vector_store %arg9[%c0_94, %c0_95, %c0_96], %144 {strides = array<i32>} : memref<1x4x128xf32, #tpu.memory_space<vmem>>, vector<1x4x128xf32>,
    return
  }
  func.func @transform_0(%arg0: i32) -> (i32, i32, i32) {
    %c0_i32 = arith.constant 0 : i32
    %c0_i32_0 = arith.constant 0 : i32
    %c0_i32_1 = arith.constant 0 : i32
    return %arg0, %c0_i32, %c0_i32_0 : i32, i32, i32
  }
  func.func @transform_1(%arg0: i32) -> (i32, i32) {
    %c0_i32 = arith.constant 0 : i32
    %c0_i32_0 = arith.constant 0 : i32
    %c0_i32_1 = arith.constant 0 : i32
    return %c0_i32, %c0_i32_0 : i32, i32
  }
  func.func @transform_2(%arg0: i32) -> (i32, i32) {
    %c0_i32 = arith.constant 0 : i32
    %c0_i32_0 = arith.constant 0 : i32
    %c0_i32_1 = arith.constant 0 : i32
    return %c0_i32, %c0_i32_0 : i32, i32
  }
  func.func @transform_3(%arg0: i32) -> (i32, i32) {
    %c0_i32 = arith.constant 0 : i32
    %c0_i32_0 = arith.constant 0 : i32
    %c0_i32_1 = arith.constant 0 : i32
    return %c0_i32, %c0_i32_0 : i32, i32
  }
  func.func @transform_4(%arg0: i32) -> (i32, i32, i32) {
    %c0_i32 = arith.constant 0 : i32
    %c0_i32_0 = arith.constant 0 : i32
    %c0_i32_1 = arith.constant 0 : i32
    %c0_i32_2 = arith.constant 0 : i32
    return %c0_i32, %c0_i32_0, %c0_i32_1 : i32, i32, i32
  }
  func.func @transform_5(%arg0: i32) -> (i32, i32) {
    %c0_i32 = arith.constant 0 : i32
    %c0_i32_0 = arith.constant 0 : i32
    %c0_i32_1 = arith.constant 0 : i32
    return %c0_i32, %c0_i32_0 : i32, i32
  }
  func.func @transform_6(%arg0: i32) -> (i32, i32, i32) {
    %c0_i32 = arith.constant 0 : i32
    %c0_i32_0 = arith.constant 0 : i32
    %c0_i32_1 = arith.constant 0 : i32
    %c0_i32_2 = arith.constant 0 : i32
    return %c0_i32, %c0_i32_0, %c0_i32_1 : i32, i32, i32
  }
  func.func @transform_7(%arg0: i32) -> (i32, i32) {
    %c0_i32 = arith.constant 0 : i32
    %c0_i32_0 = arith.constant 0 : i32
    %c0_i32_1 = arith.constant 0 : i32
    return %c0_i32, %c0_i32_0 : i32, i32
  }
  func.func @transform_8(%arg0: i32) -> (i32, i32, i32) {
    %c0_i32 = arith.constant 0 : i32
    %c0_i32_0 = arith.constant 0 : i32
    %c0_i32_1 = arith.constant 0 : i32
    return %arg0, %c0_i32, %c0_i32_0 : i32, i32, i32
  }
}

</mosaic_0001>

<llo_original>
// kernel: tpu_custom_call.1
$region0: #{tpu_custom_call.1}
  #allocation0 [shape = 'u32[]', space=smem, size = 0x4, offset = 0x4, fixed_abs, tag = 'smem constant byte address 0x4 - core index']
  #allocation1 [shape = 'u32[72,128]{1,0:T(1,128)}', space=vmem, size = 0x9000, scoped, tag = 'internal scratch']
  %s0 = inlined_call_operand.vmem [shape: f32[2,8,384], index: 0, kind: input, shape index: {}]
  %s1 = inlined_call_operand.vmem [shape: f32[1,384], index: 1, kind: input, shape index: {}]
  %s2 = inlined_call_operand.vmem [shape: f32[1,384], index: 2, kind: input, shape index: {}]
  %s3 = inlined_call_operand.hbm [shape: bf16[384,128], index: 3, kind: input, shape index: {}]
  %s4 = inlined_call_operand.vmem [shape: bf16[9,8,8], index: 4, kind: input, shape index: {}]
  %s5 = inlined_call_operand.vmem [shape: f32[8,1], index: 5, kind: input, shape index: {}]
  %s6 = inlined_call_operand.vmem [shape: bf16[9,4,8], index: 6, kind: input, shape index: {}]
  %s7 = inlined_call_operand.vmem [shape: f32[4,1], index: 7, kind: input, shape index: {}]
  %s8 = inlined_call_operand.hbm [shape: f32[2,4,128], index: 8, kind: output, shape index: {}]
  %s9 = sld [smem:[#allocation0]]
  $region69: #{tpu_custom_call.1} parent=0
    _
  %s11 = ssub.s32 1, %s9
  %s12 = scalar_select 0, %s11, %s9
  $region1: #{tpu_custom_call.1} parent=0
    #allocation2 [shape = 'u8[98304]{0}', space=vmem, size = 0x18000, scoped, tag = 'input window, operand 3, single buffered']
    #allocation3 [shape = 's32[2]{0}', space=sflag, size = 0x8, scoped, tag = 'scoped memory for tpu_custom_call.1']
    #allocation4 [shape = 's32[2]{0}', space=sflag, size = 0x8, scoped, tag = 'scoped memory for tpu_custom_call.1']
    #allocation5 [shape = 'u8[4096]{0}', space=vmem, size = 0x1000, scoped, tag = 'output window, operand 0']
    %13 = vsyncpa [#allocation3], 0
    %14 = vsyncpa [#allocation4], 0
    %s15 = scalar_lea.sflag [#allocation4], 1
    %16 = vsyncpa %s15, 0
    loop: start=0, step=1, limit=4
    $region2: #{tpu_custom_call.1} parent=1 // loop_pre_header
      _
    $region3: #{tpu_custom_call.1} parent=1 // loop_header
      %s18 = sphi 0, %s22
      %p19 = scmp.ge.s32.totalorder %s18, 4
      %s28 = sphi 0, %s30
      %s31 = sphi 0, %s28
      %s32 = sphi 0, %s31
      %s48 = sphi 0, %s32
      %s52 = sphi 0, %s52
      %s54 = sphi 0, %s52
      %s55 = sphi 0, %s54
      %s69 = sphi 0, %s55
      %s73 = sphi 0, %s73
      %s75 = sphi 0, %s73
      %s76 = sphi 0, %s75
      %s90 = sphi 0, %s76
      %s94 = sphi 0, %s94
      %s96 = sphi 0, %s94
      %s97 = sphi 0, %s96
      %s111 = sphi 0, %s97
      %s115 = sphi 0, %s115
      %s117 = sphi 0, %s115
      %s118 = sphi 0, %s117
      %s132 = sphi 0, %s118
      %s136 = sphi 0, %s136
      %s138 = sphi 0, %s136
      %s139 = sphi 0, %s138
      %s153 = sphi 0, %s139
      %s157 = sphi 0, %s157
      %s159 = sphi 0, %s157
      %s160 = sphi 0, %s159
      %s174 = sphi 0, %s160
      %s178 = sphi 0, %s178
      %s180 = sphi 0, %s178
      %s181 = sphi 0, %s180
      %s195 = sphi 0, %s181
      %s201 = sphi 0, %s203
      %s204 = sphi 0, %s201
      %s205 = sphi 0, %s204
      %s221 = sphi 0, %s205
    $region4: #{tpu_custom_call.1} parent=1 // loop_header_branch
      %21 = sbr.rel (%p19) target = $region8
    $region5: #{tpu_custom_call.1} parent=1 // loop_body
      %s23 = ssub.s32 %s18, 1
      %s24 = ssub.s32 %s18, 2
      %s25 = sadd.s32 %s18, 1
      %s26 = ssub.s32 %s18, %s25
      %p27 = scmp.eq.s32.totalorder %s26, 0
      %s29 = sadd.s32 %s28, 1
      %s30 = scalar_select %p27, %s28, %s29
      %p33 = pneg %p27
      %p34 = scmp.eq.s32.totalorder %s18, 1
      %p35 = por %p33, %p34
      %p36 = scmp.ne.s32.totalorder %s28, %s31
      %p37 = scmp.eq.s32.totalorder %s18, 0
      %p38 = por %p36, %p37
      %p39 = scmp.ne.s32.totalorder %s28, %s31
      %p40 = scmp.eq.s32.totalorder %s23, 1
      %p41 = por %p39, %p40
      %p42 = scmp.ne.s32.totalorder %s31, %s32
      %p43 = scmp.eq.s32.totalorder %s23, 0
      %p44 = por %p42, %p43
      %p45 = scmp.ne.s32.totalorder %s31, %s32
      %p46 = scmp.eq.s32.totalorder %s24, 1
      %p47 = por %p45, %p46
      %p49 = scmp.ne.s32.totalorder %s32, %s48
      %p50 = scmp.eq.s32.totalorder %s24, 0
      %p51 = por %p49, %p50
      %s53 = sadd.s32 %s52, 1
      %p56 = scmp.eq.s32.totalorder %s18, 1
      %p57 = scmp.ne.s32.totalorder %s52, %s54
      %p58 = scmp.eq.s32.totalorder %s18, 0
      %p59 = por %p57, %p58
      %p60 = scmp.ne.s32.totalorder %s52, %s54
      %p61 = scmp.eq.s32.totalorder %s23, 1
      %p62 = por %p60, %p61
      %p63 = scmp.ne.s32.totalorder %s54, %s55
      %p64 = scmp.eq.s32.totalorder %s23, 0
      %p65 = por %p63, %p64
      %p66 = scmp.ne.s32.totalorder %s54, %s55
      %p67 = scmp.eq.s32.totalorder %s24, 1
      %p68 = por %p66, %p67
      %p70 = scmp.ne.s32.totalorder %s55, %s69
      %p71 = scmp.eq.s32.totalorder %s24, 0
      %p72 = por %p70, %p71
      %s74 = sadd.s32 %s73, 1
      %p77 = scmp.eq.s32.totalorder %s18, 1
      %p78 = scmp.ne.s32.totalorder %s73, %s75
      %p79 = scmp.eq.s32.totalorder %s18, 0
      %p80 = por %p78, %p79
      %p81 = scmp.ne.s32.totalorder %s73, %s75
      %p82 = scmp.eq.s32.totalorder %s23, 1
      %p83 = por %p81, %p82
      %p84 = scmp.ne.s32.totalorder %s75, %s76
      %p85 = scmp.eq.s32.totalorder %s23, 0
      %p86 = por %p84, %p85
      %p87 = scmp.ne.s32.totalorder %s75, %s76
      %p88 = scmp.eq.s32.totalorder %s24, 1
      %p89 = por %p87, %p88
      %p91 = scmp.ne.s32.totalorder %s76, %s90
      %p92 = scmp.eq.s32.totalorder %s24, 0
      %p93 = por %p91, %p92
      %s95 = sadd.s32 %s94, 1
      %p98 = scmp.eq.s32.totalorder %s18, 1
      %p99 = scmp.ne.s32.totalorder %s94, %s96
      %p100 = scmp.eq.s32.totalorder %s18, 0
      %p101 = por %p99, %p100
      %p102 = scmp.ne.s32.totalorder %s94, %s96
      %p103 = scmp.eq.s32.totalorder %s23, 1
      %p104 = por %p102, %p103
      %p105 = scmp.ne.s32.totalorder %s96, %s97
      %p106 = scmp.eq.s32.totalorder %s23, 0
      %p107 = por %p105, %p106
      %p108 = scmp.ne.s32.totalorder %s96, %s97
      %p109 = scmp.eq.s32.totalorder %s24, 1
      %p110 = por %p108, %p109
      %p112 = scmp.ne.s32.totalorder %s97, %s111
      %p113 = scmp.eq.s32.totalorder %s24, 0
      %p114 = por %p112, %p113
      %s116 = sadd.s32 %s115, 1
      %p119 = scmp.eq.s32.totalorder %s18, 1
      %p120 = scmp.ne.s32.totalorder %s115, %s117
      %p121 = scmp.eq.s32.totalorder %s18, 0
      %p122 = por %p120, %p121
      %p123 = scmp.ne.s32.totalorder %s115, %s117
      %p124 = scmp.eq.s32.totalorder %s23, 1
      %p125 = por %p123, %p124
      %p126 = scmp.ne.s32.totalorder %s117, %s118
      %p127 = scmp.eq.s32.totalorder %s23, 0
      %p128 = por %p126, %p127
      %p129 = scmp.ne.s32.totalorder %s117, %s118
      %p130 = scmp.eq.s32.totalorder %s24, 1
      %p131 = por %p129, %p130
      %p133 = scmp.ne.s32.totalorder %s118, %s132
      %p134 = scmp.eq.s32.totalorder %s24, 0
      %p135 = por %p133, %p134
      %s137 = sadd.s32 %s136, 1
      %p140 = scmp.eq.s32.totalorder %s18, 1
      %p141 = scmp.ne.s32.totalorder %s136, %s138
      %p142 = scmp.eq.s32.totalorder %s18, 0
      %p143 = por %p141, %p142
      %p144 = scmp.ne.s32.totalorder %s136, %s138
      %p145 = scmp.eq.s32.totalorder %s23, 1
      %p146 = por %p144, %p145
      %p147 = scmp.ne.s32.totalorder %s138, %s139
      %p148 = scmp.eq.s32.totalorder %s23, 0
      %p149 = por %p147, %p148
      %p150 = scmp.ne.s32.totalorder %s138, %s139
      %p151 = scmp.eq.s32.totalorder %s24, 1
      %p152 = por %p150, %p151
      %p154 = scmp.ne.s32.totalorder %s139, %s153
      %p155 = scmp.eq.s32.totalorder %s24, 0
      %p156 = por %p154, %p155
      %s158 = sadd.s32 %s157, 1
      %p161 = scmp.eq.s32.totalorder %s18, 1
      %p162 = scmp.ne.s32.totalorder %s157, %s159
      %p163 = scmp.eq.s32.totalorder %s18, 0
      %p164 = por %p162, %p163
      %p165 = scmp.ne.s32.totalorder %s157, %s159
      %p166 = scmp.eq.s32.totalorder %s23, 1
      %p167 = por %p165, %p166
      %p168 = scmp.ne.s32.totalorder %s159, %s160
      %p169 = scmp.eq.s32.totalorder %s23, 0
      %p170 = por %p168, %p169
      %p171 = scmp.ne.s32.totalorder %s159, %s160
      %p172 = scmp.eq.s32.totalorder %s24, 1
      %p173 = por %p171, %p172
      %p175 = scmp.ne.s32.totalorder %s160, %s174
      %p176 = scmp.eq.s32.totalorder %s24, 0
      %p177 = por %p175, %p176
      %s179 = sadd.s32 %s178, 1
      %p182 = scmp.eq.s32.totalorder %s18, 1
      %p183 = scmp.ne.s32.totalorder %s178, %s180
      %p184 = scmp.eq.s32.totalorder %s18, 0
      %p185 = por %p183, %p184
      %p186 = scmp.ne.s32.totalorder %s178, %s180
      %p187 = scmp.eq.s32.totalorder %s23, 1
      %p188 = por %p186, %p187
      %p189 = scmp.ne.s32.totalorder %s180, %s181
      %p190 = scmp.eq.s32.totalorder %s23, 0
      %p191 = por %p189, %p190
      %p192 = scmp.ne.s32.totalorder %s180, %s181
      %p193 = scmp.eq.s32.totalorder %s24, 1
      %p194 = por %p192, %p193
      %p196 = scmp.ne.s32.totalorder %s181, %s195
      %p197 = scmp.eq.s32.totalorder %s24, 0
      %p198 = por %p196, %p197
      %s199 = ssub.s32 %s18, %s25
      %p200 = scmp.eq.s32.totalorder %s199, 0
      %s202 = sadd.s32 %s201, 1
      %s203 = scalar_select %p200, %s201, %s202
      %p206 = pneg %p200
      %p207 = scmp.eq.s32.totalorder %s18, 1
      %p208 = por %p206, %p207
      %p209 = scmp.ne.s32.totalorder %s201, %s204
      %p210 = scmp.eq.s32.totalorder %s18, 0
      %p211 = por %p209, %p210
      %p212 = scmp.ne.s32.totalorder %s201, %s204
      %p213 = scmp.eq.s32.totalorder %s23, 1
      %p214 = por %p212, %p213
      %p215 = scmp.ne.s32.totalorder %s204, %s205
      %p216 = scmp.eq.s32.totalorder %s23, 0
      %p217 = por %p215, %p216
      %p218 = scmp.ne.s32.totalorder %s204, %s205
      %p219 = scmp.eq.s32.totalorder %s24, 1
      %p220 = por %p218, %p219
      %p222 = scmp.ne.s32.totalorder %s205, %s221
      %p223 = scmp.eq.s32.totalorder %s24, 0
      %p224 = por %p222, %p223
      %p225 = scmp.le.s32.totalorder 1, %s18
      %p226 = scmp.lt.s32.totalorder %s18, 3
      %p227 = pnand %p225, %p226
      %p228 = pneg %p227
      // Predicated region
      $region9: #{tpu_custom_call.1} parent=5 // pred_check
        _
      $region10: #{tpu_custom_call.1} parent=5 // pred_check_branch
        %230 = sbr.rel (%p227) target = $region12
      $region11: #{tpu_custom_call.1} parent=5 // pred_region
        %s231 = ssub.s32 %s18, 1
        // Predicated region
        $region13: #{tpu_custom_call.1} parent=11 // pred_check
          %p232 = pneg %p65
        $region14: #{tpu_custom_call.1} parent=11 // pred_check_branch
          %234 = sbr.rel (%p232) target = $region16
        $region15: #{tpu_custom_call.1} parent=11 // pred_region
          _
        $region16: #{tpu_custom_call.1} parent=11 // pred_fallthru
          _
        // Predicated region
        $region17: #{tpu_custom_call.1} parent=11 // pred_check
          %p235 = pneg %p86
        $region18: #{tpu_custom_call.1} parent=11 // pred_check_branch
          %237 = sbr.rel (%p235) target = $region20
        $region19: #{tpu_custom_call.1} parent=11 // pred_region
          _
        $region20: #{tpu_custom_call.1} parent=11 // pred_fallthru
          _
        // Predicated region
        $region21: #{tpu_custom_call.1} parent=11 // pred_check
          %p238 = pneg %p107
        $region22: #{tpu_custom_call.1} parent=11 // pred_check_branch
          %240 = sbr.rel (%p238) target = $region24
        $region23: #{tpu_custom_call.1} parent=11 // pred_region
          %242 = vsyncadd [#allocation3], 0
          %s243 = sshll.u32 %s3, 4
          %s244 = int_to_ptr.hbm [resolvable:$true] %s243
          %s245 = sshll.u32 [#allocation2], 4
          %s246 = int_to_ptr.vmem [resolvable:$true] %s245
          %251 = dma.hbm_to_vmem [thread:$0]  %s244, 3072, %s246, [#allocation3], 64, 64, 4
        $region24: #{tpu_custom_call.1} parent=11 // pred_fallthru
          _
        // Predicated region
        $region25: #{tpu_custom_call.1} parent=11 // pred_check
          %p252 = pneg %p128
        $region26: #{tpu_custom_call.1} parent=11 // pred_check_branch
          %254 = sbr.rel (%p252) target = $region28
        $region27: #{tpu_custom_call.1} parent=11 // pred_region
          _
        $region28: #{tpu_custom_call.1} parent=11 // pred_fallthru
          _
        // Predicated region
        $region29: #{tpu_custom_call.1} parent=11 // pred_check
          %p255 = pneg %p149
        $region30: #{tpu_custom_call.1} parent=11 // pred_check_branch
          %257 = sbr.rel (%p255) target = $region32
        $region31: #{tpu_custom_call.1} parent=11 // pred_region
          _
        $region32: #{tpu_custom_call.1} parent=11 // pred_fallthru
          _
        // Predicated region
        $region33: #{tpu_custom_call.1} parent=11 // pred_check
          %p258 = pneg %p170
        $region34: #{tpu_custom_call.1} parent=11 // pred_check_branch
          %260 = sbr.rel (%p258) target = $region36
        $region35: #{tpu_custom_call.1} parent=11 // pred_region
          _
        $region36: #{tpu_custom_call.1} parent=11 // pred_fallthru
          _
        // Predicated region
        $region37: #{tpu_custom_call.1} parent=11 // pred_check
          %p261 = pneg %p191
        $region38: #{tpu_custom_call.1} parent=11 // pred_check_branch
          %263 = sbr.rel (%p261) target = $region40
        $region39: #{tpu_custom_call.1} parent=11 // pred_region
          _
        $region40: #{tpu_custom_call.1} parent=11 // pred_fallthru
          _
      $region12: #{tpu_custom_call.1} parent=5 // pred_fallthru
        _
      %p264 = scmp.lt.s32.totalorder %s18, 2
      // Predicated region
      $region41: #{tpu_custom_call.1} parent=5 // pred_check
        %p265 = pneg %p264
      $region42: #{tpu_custom_call.1} parent=5 // pred_check_branch
        %267 = sbr.rel (%p265) target = $region44
      $region43: #{tpu_custom_call.1} parent=5 // pred_region
        // Predicated region
        $region45: #{tpu_custom_call.1} parent=43 // pred_check
          %p268 = pneg %p38
        $region46: #{tpu_custom_call.1} parent=43 // pred_check_branch
          %270 = sbr.rel (%p268) target = $region48
        $region47: #{tpu_custom_call.1} parent=43 // pred_region
          %p271 = scmp.lt.s32.totalorder %s18, 1
          %s272 = scalar_select %p271, %s18, 1
          %s273 = smul.addr %s272, 3
          %s274 = smul.addr %s273, 8
          %s275 = scalar_lea.vmem %s0, %s274
        $region48: #{tpu_custom_call.1} parent=43 // pred_fallthru
          _
      $region44: #{tpu_custom_call.1} parent=5 // pred_fallthru
        _
      %p276 = scmp.le.s32.totalorder 1, %s18
      %p277 = scmp.lt.s32.totalorder %s18, 3
      %p278 = pnand %p276, %p277
      %p279 = pneg %p278
      // Predicated region
      $region49: #{tpu_custom_call.1} parent=5 // pred_check
        _
      $region50: #{tpu_custom_call.1} parent=5 // pred_check_branch
        %281 = sbr.rel (%p278) target = $region52
      $region51: #{tpu_custom_call.1} parent=5 // pred_region
        %s282 = ssub.s32 %s18, 1
        // Predicated region
        $region53: #{tpu_custom_call.1} parent=51 // pred_check
          %p283 = pneg %p107
        $region54: #{tpu_custom_call.1} parent=51 // pred_check_branch
          %285 = sbr.rel (%p283) target = $region56
        $region55: #{tpu_custom_call.1} parent=51 // pred_region
          %287 = dma.done [#allocation3], 3072
        $region56: #{tpu_custom_call.1} parent=51 // pred_fallthru
          _
        %p288 = scmp.lt.s32.totalorder %s23, 1
        %s289 = scalar_select %p288, %s23, 1
        %s290 = smul.addr %s289, 3
        %s291 = smul.addr %s290, 8
        %s292 = scalar_lea.vmem %s0, %s291
        %p293 = pneg %p44
        %p294 = pneg %p41
        %p295 = pneg %p65
        %p296 = pneg %p62
        %p297 = pneg %p86
        %p298 = pneg %p83
        %p299 = pneg %p107
        %p300 = pneg %p104
        %p301 = pneg %p128
        %p302 = pneg %p125
        %p303 = pneg %p149
        %p304 = pneg %p146
        %p305 = pneg %p170
        %p306 = pneg %p167
        %p307 = pneg %p191
        %p308 = pneg %p188
        %p309 = pneg %p217
        %p310 = pneg %p214
        %s311 = sand.u32 %s204, 1
        %s312 = scalar_lea.sflag [#allocation4], %s311
        %s313 = sand.u32 %s204, 1
        %s314 = smul.addr %s313, 4
        %s315 = scalar_lea.vmem [#allocation5], %s314
        %p316 = scmp.lt.s32.totalorder %s23, 1
        %s317 = scalar_select %p316, %s23, 1
        %s318 = smul.addr %s317, 3
        %s319 = smul.addr %s318, 8
        %s320 = scalar_lea.vmem %s0, %s319
        %v322 = vld [vmem:[%s1] sm:$0x7]
        %v323 = vld [vmem:[%s2] sm:$0x7]
        %v324 = vld [vmem:[%s320] sm:$0xff]
        %v325 = vld [vmem:[%s320 + $0x8] sm:$0xff]
        %v326 = vld [vmem:[%s320 + $0x10] sm:$0xff]
        %327 = vrot.lane.b32.xlu0 %v324, 19
        %v328 = vpop.permute.xlu0 %327
        %329 = vrot.lane.b32.xlu0 %v325, 19
        %v330 = vpop.permute.xlu0 %329
        %331 = vrot.lane.b32.xlu0 %v326, 19
        %v332 = vpop.permute.xlu0 %331
        %v333 = vlaneseq
        %v334 = vand.u32 %v333, 127
        %vm335 = vcmp.lt.s32.totalorder %v334, 19
        %v336 = vsel %vm335, %v330, %v332
        %v337 = vsel %vm335, %v328, %v330
        %v338 = vsel %vm335, %v332, %v328
        %v339 = vld [vmem:[%s4] sm:$0xf]
        %v340 = vpack.c.bf16 %v338, %v338
        %v341 = vpack.c.bf16 %v337, %v337
        %v342 = vpack.c.bf16 %v336, %v336
        %343 = vrot.lane.b32.xlu0 %v324, 18
        %v344 = vpop.permute.xlu0 %343
        %345 = vrot.lane.b32.xlu0 %v325, 18
        %v346 = vpop.permute.xlu0 %345
        %347 = vrot.lane.b32.xlu0 %v326, 18
        %v348 = vpop.permute.xlu0 %347
        %vm349 = vcmp.lt.s32.totalorder %v334, 18
        %v350 = vsel %vm349, %v346, %v348
        %v351 = vsel %vm349, %v344, %v346
        %v352 = vsel %vm349, %v348, %v344
        %s353 = scalar_lea.vmem %s4, 4
        %v354 = vld [vmem:[%s353] sm:$0xf]
        %v355 = vpack.c.bf16 %v352, %v352
        %v356 = vpack.c.bf16 %v351, %v351
        %v357 = vpack.c.bf16 %v350, %v350
        %vm358 = vcmask 64512
        %v360 = vsel %vm358, %v354, 0
        %vm362 = vcmask 1043456
        %v364 = vsel %vm362, %v355, 0
        %v367 = vsel %vm362, %v356, 0
        %v370 = vsel %vm362, %v357, 0
        %372 = vmatpush.bf16.msra.mxu0 0
        %373 = vmatpush.bf16.msra.mxu0 0
        %374 = vmatpush.bf16.msra.mxu0 0
        %375 = vmatpush.bf16.msra.mxu0 0
        %376 = vmatpush.bf16.msra.mxu0 0
        %377 = vmatpush.bf16.msra.mxu0 0
        %378 = vmatpush.bf16.msra.mxu0 0
        %379 = vmatpush.bf16.msra.mxu0 %v364
        %380 = vmatmul.bf16.gmra.mxu0 %v360
        %v381 = vpop.f32.mrf.mxu0
        %v382 = vadd.f32 0.0, %v381
        %v383 = vpop.f32.mrf.mxu0
        %384 = vdwg.mxu0
        %385 = vmatpush.bf16.msra.mxu0 0
        %386 = vmatpush.bf16.msra.mxu0 0
        %387 = vmatpush.bf16.msra.mxu0 0
        %388 = vmatpush.bf16.msra.mxu0 0
        %389 = vmatpush.bf16.msra.mxu0 0
        %390 = vmatpush.bf16.msra.mxu0 0
        %391 = vmatpush.bf16.msra.mxu0 0
        %392 = vmatpush.bf16.msra.mxu0 %v367
        %393 = vmatmul.bf16.gmra.mxu0 %v360
        %v394 = vpop.f32.mrf.mxu0
        %v395 = vadd.f32 0.0, %v394
        %v396 = vpop.f32.mrf.mxu0
        %397 = vdwg.mxu0
        %398 = vmatpush.bf16.msra.mxu0 0
        %399 = vmatpush.bf16.msra.mxu0 0
        %400 = vmatpush.bf16.msra.mxu0 0
        %401 = vmatpush.bf16.msra.mxu0 0
        %402 = vmatpush.bf16.msra.mxu0 0
        %403 = vmatpush.bf16.msra.mxu0 0
        %404 = vmatpush.bf16.msra.mxu0 0
        %405 = vmatpush.bf16.msra.mxu0 %v370
        %406 = vmatmul.bf16.gmra.mxu0 %v360
        %v407 = vpop.f32.mrf.mxu0
        %v408 = vadd.f32 0.0, %v407
        %v409 = vpop.f32.mrf.mxu0
        %410 = vdwg.mxu0
        %v412 = vsel %vm358, %v339, 0
        %v415 = vsel %vm362, %v340, 0
        %v418 = vsel %vm362, %v341, 0
        %v421 = vsel %vm362, %v342, 0
        %423 = vmatpush.bf16.msra.mxu0 0
        %424 = vmatpush.bf16.msra.mxu0 0
        %425 = vmatpush.bf16.msra.mxu0 0
        %426 = vmatpush.bf16.msra.mxu0 0
        %427 = vmatpush.bf16.msra.mxu0 0
        %428 = vmatpush.bf16.msra.mxu0 0
        %429 = vmatpush.bf16.msra.mxu0 0
        %430 = vmatpush.bf16.msra.mxu0 %v415
        %431 = vmatmul.bf16.gmra.mxu0 %v412
        %v432 = vpop.f32.mrf.mxu0
        %v433 = vadd.f32 %v382, %v432
        %v434 = vpop.f32.mrf.mxu0
        %435 = vdwg.mxu0
        %436 = vmatpush.bf16.msra.mxu0 0
        %437 = vmatpush.bf16.msra.mxu0 0
        %438 = vmatpush.bf16.msra.mxu0 0
        %439 = vmatpush.bf16.msra.mxu0 0
        %440 = vmatpush.bf16.msra.mxu0 0
        %441 = vmatpush.bf16.msra.mxu0 0
        %442 = vmatpush.bf16.msra.mxu0 0
        %443 = vmatpush.bf16.msra.mxu0 %v418
        %444 = vmatmul.bf16.gmra.mxu0 %v412
        %v445 = vpop.f32.mrf.mxu0
        %v446 = vadd.f32 %v395, %v445
        %v447 = vpop.f32.mrf.mxu0
        %448 = vdwg.mxu0
        %449 = vmatpush.bf16.msra.mxu0 0
        %450 = vmatpush.bf16.msra.mxu0 0
        %451 = vmatpush.bf16.msra.mxu0 0
        %452 = vmatpush.bf16.msra.mxu0 0
        %453 = vmatpush.bf16.msra.mxu0 0
        %454 = vmatpush.bf16.msra.mxu0 0
        %455 = vmatpush.bf16.msra.mxu0 0
        %456 = vmatpush.bf16.msra.mxu0 %v421
        %457 = vmatmul.bf16.gmra.mxu0 %v412
        %v458 = vpop.f32.mrf.mxu0
        %v459 = vadd.f32 %v408, %v458
        %v460 = vpop.f32.mrf.mxu0
        %461 = vdwg.mxu0
        %462 = vrot.lane.b32.xlu0 %v324, 17
        %v463 = vpop.permute.xlu0 %462
        %464 = vrot.lane.b32.xlu0 %v325, 17
        %v465 = vpop.permute.xlu0 %464
        %466 = vrot.lane.b32.xlu0 %v326, 17
        %v467 = vpop.permute.xlu0 %466
        %vm468 = vcmp.lt.s32.totalorder %v334, 17
        %v469 = vsel %vm468, %v465, %v467
        %v470 = vsel %vm468, %v463, %v465
        %v471 = vsel %vm468, %v467, %v463
        %s472 = scalar_lea.vmem %s4, 8
        %v473 = vld [vmem:[%s472] sm:$0xf]
        %v474 = vpack.c.bf16 %v471, %v471
        %v475 = vpack.c.bf16 %v470, %v470
        %v476 = vpack.c.bf16 %v469, %v469
        %v478 = vsel %vm358, %v473, 0
        %v481 = vsel %vm362, %v474, 0
        %v484 = vsel %vm362, %v475, 0
        %v487 = vsel %vm362, %v476, 0
        %489 = vmatpush.bf16.msra.mxu0 0
        %490 = vmatpush.bf16.msra.mxu0 0
        %491 = vmatpush.bf16.msra.mxu0 0
        %492 = vmatpush.bf16.msra.mxu0 0
        %493 = vmatpush.bf16.msra.mxu0 0
        %494 = vmatpush.bf16.msra.mxu0 0
        %495 = vmatpush.bf16.msra.mxu0 0
        %496 = vmatpush.bf16.msra.mxu0 %v481
        %497 = vmatmul.bf16.gmra.mxu0 %v478
        %v498 = vpop.f32.mrf.mxu0
        %v499 = vadd.f32 0.0, %v498
        %v500 = vpop.f32.mrf.mxu0
        %501 = vdwg.mxu0
        %502 = vmatpush.bf16.msra.mxu0 0
        %503 = vmatpush.bf16.msra.mxu0 0
        %504 = vmatpush.bf16.msra.mxu0 0
        %505 = vmatpush.bf16.msra.mxu0 0
        %506 = vmatpush.bf16.msra.mxu0 0
        %507 = vmatpush.bf16.msra.mxu0 0
        %508 = vmatpush.bf16.msra.mxu0 0
        %509 = vmatpush.bf16.msra.mxu0 %v484
        %510 = vmatmul.bf16.gmra.mxu0 %v478
        %v511 = vpop.f32.mrf.mxu0
        %v512 = vadd.f32 0.0, %v511
        %v513 = vpop.f32.mrf.mxu0
        %514 = vdwg.mxu0
        %515 = vmatpush.bf16.msra.mxu0 0
        %516 = vmatpush.bf16.msra.mxu0 0
        %517 = vmatpush.bf16.msra.mxu0 0
        %518 = vmatpush.bf16.msra.mxu0 0
        %519 = vmatpush.bf16.msra.mxu0 0
        %520 = vmatpush.bf16.msra.mxu0 0
        %521 = vmatpush.bf16.msra.mxu0 0
        %522 = vmatpush.bf16.msra.mxu0 %v487
        %523 = vmatmul.bf16.gmra.mxu0 %v478
        %v524 = vpop.f32.mrf.mxu0
        %v525 = vadd.f32 0.0, %v524
        %v526 = vpop.f32.mrf.mxu0
        %527 = vdwg.mxu0
        %v528 = vadd.f32 %v433, %v499
        %v529 = vadd.f32 %v446, %v512
        %v530 = vadd.f32 %v459, %v525
        %531 = vrot.lane.b32.xlu0 %v324, 1
        %v532 = vpop.permute.xlu0 %531
        %533 = vrot.lane.b32.xlu0 %v325, 1
        %v534 = vpop.permute.xlu0 %533
        %535 = vrot.lane.b32.xlu0 %v326, 1
        %v536 = vpop.permute.xlu0 %535
        %vm537 = vcmp.lt.s32.totalorder %v334, 1
        %v538 = vsel %vm537, %v534, %v536
        %v539 = vsel %vm537, %v532, %v534
        %v540 = vsel %vm537, %v536, %v532
        %s541 = scalar_lea.vmem %s4, 12
        %v542 = vld [vmem:[%s541] sm:$0xf]
        %v543 = vpack.c.bf16 %v540, %v540
        %v544 = vpack.c.bf16 %v539, %v539
        %v545 = vpack.c.bf16 %v538, %v538
        %v547 = vsel %vm358, %v542, 0
        %v550 = vsel %vm362, %v543, 0
        %v553 = vsel %vm362, %v544, 0
        %v556 = vsel %vm362, %v545, 0
        %558 = vmatpush.bf16.msra.mxu0 0
        %559 = vmatpush.bf16.msra.mxu0 0
        %560 = vmatpush.bf16.msra.mxu0 0
        %561 = vmatpush.bf16.msra.mxu0 0
        %562 = vmatpush.bf16.msra.mxu0 0
        %563 = vmatpush.bf16.msra.mxu0 0
        %564 = vmatpush.bf16.msra.mxu0 0
        %565 = vmatpush.bf16.msra.mxu0 %v550
        %566 = vmatmul.bf16.gmra.mxu0 %v547
        %v567 = vpop.f32.mrf.mxu0
        %v568 = vadd.f32 0.0, %v567
        %v569 = vpop.f32.mrf.mxu0
        %570 = vdwg.mxu0
        %571 = vmatpush.bf16.msra.mxu0 0
        %572 = vmatpush.bf16.msra.mxu0 0
        %573 = vmatpush.bf16.msra.mxu0 0
        %574 = vmatpush.bf16.msra.mxu0 0
        %575 = vmatpush.bf16.msra.mxu0 0
        %576 = vmatpush.bf16.msra.mxu0 0
        %577 = vmatpush.bf16.msra.mxu0 0
        %578 = vmatpush.bf16.msra.mxu0 %v553
        %579 = vmatmul.bf16.gmra.mxu0 %v547
        %v580 = vpop.f32.mrf.mxu0
        %v581 = vadd.f32 0.0, %v580
        %v582 = vpop.f32.mrf.mxu0
        %583 = vdwg.mxu0
        %584 = vmatpush.bf16.msra.mxu0 0
        %585 = vmatpush.bf16.msra.mxu0 0
        %586 = vmatpush.bf16.msra.mxu0 0
        %587 = vmatpush.bf16.msra.mxu0 0
        %588 = vmatpush.bf16.msra.mxu0 0
        %589 = vmatpush.bf16.msra.mxu0 0
        %590 = vmatpush.bf16.msra.mxu0 0
        %591 = vmatpush.bf16.msra.mxu0 %v556
        %592 = vmatmul.bf16.gmra.mxu0 %v547
        %v593 = vpop.f32.mrf.mxu0
        %v594 = vadd.f32 0.0, %v593
        %v595 = vpop.f32.mrf.mxu0
        %596 = vdwg.mxu0
        %v597 = vadd.f32 %v528, %v568
        %v598 = vadd.f32 %v529, %v581
        %v599 = vadd.f32 %v530, %v594
        %s600 = scalar_lea.vmem %s4, 16
        %v601 = vld [vmem:[%s600] sm:$0xf]
        %v602 = vpack.c.bf16 %v324, %v324
        %v603 = vpack.c.bf16 %v325, %v325
        %v604 = vpack.c.bf16 %v326, %v326
        %v606 = vsel %vm358, %v601, 0
        %v609 = vsel %vm362, %v602, 0
        %v612 = vsel %vm362, %v603, 0
        %v615 = vsel %vm362, %v604, 0
        %617 = vmatpush.bf16.msra.mxu0 0
        %618 = vmatpush.bf16.msra.mxu0 0
        %619 = vmatpush.bf16.msra.mxu0 0
        %620 = vmatpush.bf16.msra.mxu0 0
        %621 = vmatpush.bf16.msra.mxu0 0
        %622 = vmatpush.bf16.msra.mxu0 0
        %623 = vmatpush.bf16.msra.mxu0 0
        %624 = vmatpush.bf16.msra.mxu0 %v609
        %625 = vmatmul.bf16.gmra.mxu0 %v606
        %v626 = vpop.f32.mrf.mxu0
        %v627 = vadd.f32 0.0, %v626
        %v628 = vpop.f32.mrf.mxu0
        %629 = vdwg.mxu0
        %630 = vmatpush.bf16.msra.mxu0 0
        %631 = vmatpush.bf16.msra.mxu0 0
        %632 = vmatpush.bf16.msra.mxu0 0
        %633 = vmatpush.bf16.msra.mxu0 0
        %634 = vmatpush.bf16.msra.mxu0 0
        %635 = vmatpush.bf16.msra.mxu0 0
        %636 = vmatpush.bf16.msra.mxu0 0
        %637 = vmatpush.bf16.msra.mxu0 %v612
        %638 = vmatmul.bf16.gmra.mxu0 %v606
        %v639 = vpop.f32.mrf.mxu0
        %v640 = vadd.f32 0.0, %v639
        %v641 = vpop.f32.mrf.mxu0
        %642 = vdwg.mxu0
        %643 = vmatpush.bf16.msra.mxu0 0
        %644 = vmatpush.bf16.msra.mxu0 0
        %645 = vmatpush.bf16.msra.mxu0 0
        %646 = vmatpush.bf16.msra.mxu0 0
        %647 = vmatpush.bf16.msra.mxu0 0
        %648 = vmatpush.bf16.msra.mxu0 0
        %649 = vmatpush.bf16.msra.mxu0 0
        %650 = vmatpush.bf16.msra.mxu0 %v615
        %651 = vmatmul.bf16.gmra.mxu0 %v606
        %v652 = vpop.f32.mrf.mxu0
        %v653 = vadd.f32 0.0, %v652
        %v654 = vpop.f32.mrf.mxu0
        %655 = vdwg.mxu0
        %v656 = vadd.f32 %v597, %v627
        %v657 = vadd.f32 %v598, %v640
        %v658 = vadd.f32 %v599, %v653
        %659 = vrot.lane.b32.xlu0 %v324, 127
        %v660 = vpop.permute.xlu0 %659
        %661 = vrot.lane.b32.xlu0 %v325, 127
        %v662 = vpop.permute.xlu0 %661
        %663 = vrot.lane.b32.xlu0 %v326, 127
        %v664 = vpop.permute.xlu0 %663
        %vm665 = vcmp.lt.s32.totalorder %v334, 127
        %v666 = vsel %vm665, %v662, %v664
        %v667 = vsel %vm665, %v660, %v662
        %v668 = vsel %vm665, %v664, %v660
        %s669 = scalar_lea.vmem %s4, 20
        %v670 = vld [vmem:[%s669] sm:$0xf]
        %v671 = vpack.c.bf16 %v667, %v667
        %v672 = vpack.c.bf16 %v666, %v666
        %v673 = vpack.c.bf16 %v668, %v668
        %v675 = vsel %vm358, %v670, 0
        %v678 = vsel %vm362, %v671, 0
        %v681 = vsel %vm362, %v672, 0
        %v684 = vsel %vm362, %v673, 0
        %686 = vmatpush.bf16.msra.mxu0 0
        %687 = vmatpush.bf16.msra.mxu0 0
        %688 = vmatpush.bf16.msra.mxu0 0
        %689 = vmatpush.bf16.msra.mxu0 0
        %690 = vmatpush.bf16.msra.mxu0 0
        %691 = vmatpush.bf16.msra.mxu0 0
        %692 = vmatpush.bf16.msra.mxu0 0
        %693 = vmatpush.bf16.msra.mxu0 %v678
        %694 = vmatmul.bf16.gmra.mxu0 %v675
        %v695 = vpop.f32.mrf.mxu0
        %v696 = vadd.f32 0.0, %v695
        %v697 = vpop.f32.mrf.mxu0
        %698 = vdwg.mxu0
        %699 = vmatpush.bf16.msra.mxu0 0
        %700 = vmatpush.bf16.msra.mxu0 0
        %701 = vmatpush.bf16.msra.mxu0 0
        %702 = vmatpush.bf16.msra.mxu0 0
        %703 = vmatpush.bf16.msra.mxu0 0
        %704 = vmatpush.bf16.msra.mxu0 0
        %705 = vmatpush.bf16.msra.mxu0 0
        %706 = vmatpush.bf16.msra.mxu0 %v681
        %707 = vmatmul.bf16.gmra.mxu0 %v675
        %v708 = vpop.f32.mrf.mxu0
        %v709 = vadd.f32 0.0, %v708
        %v710 = vpop.f32.mrf.mxu0
        %711 = vdwg.mxu0
        %712 = vmatpush.bf16.msra.mxu0 0
        %713 = vmatpush.bf16.msra.mxu0 0
        %714 = vmatpush.bf16.msra.mxu0 0
        %715 = vmatpush.bf16.msra.mxu0 0
        %716 = vmatpush.bf16.msra.mxu0 0
        %717 = vmatpush.bf16.msra.mxu0 0
        %718 = vmatpush.bf16.msra.mxu0 0
        %719 = vmatpush.bf16.msra.mxu0 %v684
        %720 = vmatmul.bf16.gmra.mxu0 %v675
        %v721 = vpop.f32.mrf.mxu0
        %v722 = vadd.f32 0.0, %v721
        %v723 = vpop.f32.mrf.mxu0
        %724 = vdwg.mxu0
        %v725 = vadd.f32 %v656, %v696
        %v726 = vadd.f32 %v657, %v709
        %v727 = vadd.f32 %v658, %v722
        %728 = vrot.lane.b32.xlu0 %v324, 111
        %v729 = vpop.permute.xlu0 %728
        %730 = vrot.lane.b32.xlu0 %v325, 111
        %v731 = vpop.permute.xlu0 %730
        %732 = vrot.lane.b32.xlu0 %v326, 111
        %v733 = vpop.permute.xlu0 %732
        %vm734 = vcmp.lt.s32.totalorder %v334, 111
        %v735 = vsel %vm734, %v731, %v733
        %v736 = vsel %vm734, %v729, %v731
        %v737 = vsel %vm734, %v733, %v729
        %s738 = scalar_lea.vmem %s4, 24
        %v739 = vld [vmem:[%s738] sm:$0xf]
        %v740 = vpack.c.bf16 %v736, %v736
        %v741 = vpack.c.bf16 %v735, %v735
        %v742 = vpack.c.bf16 %v737, %v737
        %v744 = vsel %vm358, %v739, 0
        %v747 = vsel %vm362, %v740, 0
        %v750 = vsel %vm362, %v741, 0
        %v753 = vsel %vm362, %v742, 0
        %755 = vmatpush.bf16.msra.mxu0 0
        %756 = vmatpush.bf16.msra.mxu0 0
        %757 = vmatpush.bf16.msra.mxu0 0
        %758 = vmatpush.bf16.msra.mxu0 0
        %759 = vmatpush.bf16.msra.mxu0 0
        %760 = vmatpush.bf16.msra.mxu0 0
        %761 = vmatpush.bf16.msra.mxu0 0
        %762 = vmatpush.bf16.msra.mxu0 %v747
        %763 = vmatmul.bf16.gmra.mxu0 %v744
        %v764 = vpop.f32.mrf.mxu0
        %v765 = vadd.f32 0.0, %v764
        %v766 = vpop.f32.mrf.mxu0
        %767 = vdwg.mxu0
        %768 = vmatpush.bf16.msra.mxu0 0
        %769 = vmatpush.bf16.msra.mxu0 0
        %770 = vmatpush.bf16.msra.mxu0 0
        %771 = vmatpush.bf16.msra.mxu0 0
        %772 = vmatpush.bf16.msra.mxu0 0
        %773 = vmatpush.bf16.msra.mxu0 0
        %774 = vmatpush.bf16.msra.mxu0 0
        %775 = vmatpush.bf16.msra.mxu0 %v750
        %776 = vmatmul.bf16.gmra.mxu0 %v744
        %v777 = vpop.f32.mrf.mxu0
        %v778 = vadd.f32 0.0, %v777
        %v779 = vpop.f32.mrf.mxu0
        %780 = vdwg.mxu0
        %781 = vmatpush.bf16.msra.mxu0 0
        %782 = vmatpush.bf16.msra.mxu0 0
        %783 = vmatpush.bf16.msra.mxu0 0
        %784 = vmatpush.bf16.msra.mxu0 0
        %785 = vmatpush.bf16.msra.mxu0 0
        %786 = vmatpush.bf16.msra.mxu0 0
        %787 = vmatpush.bf16.msra.mxu0 0
        %788 = vmatpush.bf16.msra.mxu0 %v753
        %789 = vmatmul.bf16.gmra.mxu0 %v744
        %v790 = vpop.f32.mrf.mxu0
        %v791 = vadd.f32 0.0, %v790
        %v792 = vpop.f32.mrf.mxu0
        %793 = vdwg.mxu0
        %v794 = vadd.f32 %v725, %v765
        %v795 = vadd.f32 %v726, %v778
        %v796 = vadd.f32 %v727, %v791
        %797 = vrot.lane.b32.xlu0 %v324, 110
        %v798 = vpop.permute.xlu0 %797
        %799 = vrot.lane.b32.xlu0 %v325, 110
        %v800 = vpop.permute.xlu0 %799
        %801 = vrot.lane.b32.xlu0 %v326, 110
        %v802 = vpop.permute.xlu0 %801
        %vm803 = vcmp.lt.s32.totalorder %v334, 110
        %v804 = vsel %vm803, %v800, %v802
        %v805 = vsel %vm803, %v798, %v800
        %v806 = vsel %vm803, %v802, %v798
        %s807 = scalar_lea.vmem %s4, 28
        %v808 = vld [vmem:[%s807] sm:$0xf]
        %v809 = vpack.c.bf16 %v805, %v805
        %v810 = vpack.c.bf16 %v804, %v804
        %v811 = vpack.c.bf16 %v806, %v806
        %v813 = vsel %vm358, %v808, 0
        %v816 = vsel %vm362, %v809, 0
        %v819 = vsel %vm362, %v810, 0
        %v822 = vsel %vm362, %v811, 0
        %824 = vmatpush.bf16.msra.mxu0 0
        %825 = vmatpush.bf16.msra.mxu0 0
        %826 = vmatpush.bf16.msra.mxu0 0
        %827 = vmatpush.bf16.msra.mxu0 0
        %828 = vmatpush.bf16.msra.mxu0 0
        %829 = vmatpush.bf16.msra.mxu0 0
        %830 = vmatpush.bf16.msra.mxu0 0
        %831 = vmatpush.bf16.msra.mxu0 %v816
        %832 = vmatmul.bf16.gmra.mxu0 %v813
        %v833 = vpop.f32.mrf.mxu0
        %v834 = vadd.f32 0.0, %v833
        %v835 = vpop.f32.mrf.mxu0
        %836 = vdwg.mxu0
        %837 = vmatpush.bf16.msra.mxu0 0
        %838 = vmatpush.bf16.msra.mxu0 0
        %839 = vmatpush.bf16.msra.mxu0 0
        %840 = vmatpush.bf16.msra.mxu0 0
        %841 = vmatpush.bf16.msra.mxu0 0
        %842 = vmatpush.bf16.msra.mxu0 0
        %843 = vmatpush.bf16.msra.mxu0 0
        %844 = vmatpush.bf16.msra.mxu0 %v819
        %845 = vmatmul.bf16.gmra.mxu0 %v813
        %v846 = vpop.f32.mrf.mxu0
        %v847 = vadd.f32 0.0, %v846
        %v848 = vpop.f32.mrf.mxu0
        %849 = vdwg.mxu0
        %850 = vmatpush.bf16.msra.mxu0 0
        %851 = vmatpush.bf16.msra.mxu0 0
        %852 = vmatpush.bf16.msra.mxu0 0
        %853 = vmatpush.bf16.msra.mxu0 0
        %854 = vmatpush.bf16.msra.mxu0 0
        %855 = vmatpush.bf16.msra.mxu0 0
        %856 = vmatpush.bf16.msra.mxu0 0
        %857 = vmatpush.bf16.msra.mxu0 %v822
        %858 = vmatmul.bf16.gmra.mxu0 %v813
        %v859 = vpop.f32.mrf.mxu0
        %v860 = vadd.f32 0.0, %v859
        %v861 = vpop.f32.mrf.mxu0
        %862 = vdwg.mxu0
        %v863 = vadd.f32 %v794, %v834
        %v864 = vadd.f32 %v795, %v847
        %v865 = vadd.f32 %v796, %v860
        %866 = vrot.lane.b32.xlu0 %v324, 109
        %v867 = vpop.permute.xlu0 %866
        %868 = vrot.lane.b32.xlu0 %v325, 109
        %v869 = vpop.permute.xlu0 %868
        %870 = vrot.lane.b32.xlu0 %v326, 109
        %v871 = vpop.permute.xlu0 %870
        %vm872 = vcmp.lt.s32.totalorder %v334, 109
        %v873 = vsel %vm872, %v869, %v871
        %v874 = vsel %vm872, %v867, %v869
        %v875 = vsel %vm872, %v871, %v867
        %s876 = scalar_lea.vmem %s4, 32
        %v877 = vld [vmem:[%s876] sm:$0xf]
        %v878 = vpack.c.bf16 %v874, %v874
        %v879 = vpack.c.bf16 %v873, %v873
        %v880 = vpack.c.bf16 %v875, %v875
        %v882 = vsel %vm358, %v877, 0
        %v885 = vsel %vm362, %v878, 0
        %v888 = vsel %vm362, %v879, 0
        %v891 = vsel %vm362, %v880, 0
        %893 = vmatpush.bf16.msra.mxu0 0
        %894 = vmatpush.bf16.msra.mxu0 0
        %895 = vmatpush.bf16.msra.mxu0 0
        %896 = vmatpush.bf16.msra.mxu0 0
        %897 = vmatpush.bf16.msra.mxu0 0
        %898 = vmatpush.bf16.msra.mxu0 0
        %899 = vmatpush.bf16.msra.mxu0 0
        %900 = vmatpush.bf16.msra.mxu0 %v885
        %901 = vmatmul.bf16.gmra.mxu0 %v882
        %v902 = vpop.f32.mrf.mxu0
        %v903 = vadd.f32 0.0, %v902
        %v904 = vpop.f32.mrf.mxu0
        %905 = vdwg.mxu0
        %906 = vmatpush.bf16.msra.mxu0 0
        %907 = vmatpush.bf16.msra.mxu0 0
        %908 = vmatpush.bf16.msra.mxu0 0
        %909 = vmatpush.bf16.msra.mxu0 0
        %910 = vmatpush.bf16.msra.mxu0 0
        %911 = vmatpush.bf16.msra.mxu0 0
        %912 = vmatpush.bf16.msra.mxu0 0
        %913 = vmatpush.bf16.msra.mxu0 %v888
        %914 = vmatmul.bf16.gmra.mxu0 %v882
        %v915 = vpop.f32.mrf.mxu0
        %v916 = vadd.f32 0.0, %v915
        %v917 = vpop.f32.mrf.mxu0
        %918 = vdwg.mxu0
        %919 = vmatpush.bf16.msra.mxu0 0
        %920 = vmatpush.bf16.msra.mxu0 0
        %921 = vmatpush.bf16.msra.mxu0 0
        %922 = vmatpush.bf16.msra.mxu0 0
        %923 = vmatpush.bf16.msra.mxu0 0
        %924 = vmatpush.bf16.msra.mxu0 0
        %925 = vmatpush.bf16.msra.mxu0 0
        %926 = vmatpush.bf16.msra.mxu0 %v891
        %927 = vmatmul.bf16.gmra.mxu0 %v882
        %v928 = vpop.f32.mrf.mxu0
        %v929 = vadd.f32 0.0, %v928
        %v930 = vpop.f32.mrf.mxu0
        %931 = vdwg.mxu0
        %v932 = vadd.f32 %v863, %v903
        %v933 = vadd.f32 %v864, %v916
        %v934 = vadd.f32 %v865, %v929
        %v935 = vld [vmem:[%s5] sm:$0xff]
        %937 = vset.pattern.permute.xlu0 0
        %938 = vperm.xlu0 %937, %v935
        %v939 = vpop.permute.xlu0 %938
        %v941 = vadd.f32 %v932, %v939
        %v942 = vadd.f32 %v933, %v939
        %v943 = vadd.f32 %v934, %v939
        %v944 = vmax.f32 %v941, 0.0
        %v945 = vmax.f32 %v942, 0.0
        %v946 = vmax.f32 %v943, 0.0
        %v948 = vperm.slane %v322, 0
        %v949 = vperm.slane %v322, 1
        %v950 = vperm.slane %v322, 2
        %v954 = vmul.f32 %v944, %v948
        %v955 = vmul.f32 %v945, %v949
        %v956 = vmul.f32 %v946, %v950
        %957 = vrot.lane.b32.xlu0 %v954, 19
        %v958 = vpop.permute.xlu0 %957
        %959 = vrot.lane.b32.xlu0 %v955, 19
        %v960 = vpop.permute.xlu0 %959
        %961 = vrot.lane.b32.xlu0 %v956, 19
        %v962 = vpop.permute.xlu0 %961
        %v963 = vsel %vm335, %v960, %v962
        %v964 = vsel %vm335, %v958, %v960
        %v965 = vsel %vm335, %v962, %v958
        %v966 = vadd.f32 %v954, %v965
        %v967 = vadd.f32 %v955, %v964
        %v968 = vadd.f32 %v956, %v963
        %969 = vrot.lane.b32.xlu0 %v954, 18
        %v970 = vpop.permute.xlu0 %969
        %971 = vrot.lane.b32.xlu0 %v955, 18
        %v972 = vpop.permute.xlu0 %971
        %973 = vrot.lane.b32.xlu0 %v956, 18
        %v974 = vpop.permute.xlu0 %973
        %v975 = vsel %vm349, %v972, %v974
        %v976 = vsel %vm349, %v970, %v972
        %v977 = vsel %vm349, %v974, %v970
        %v978 = vadd.f32 %v966, %v977
        %v979 = vadd.f32 %v967, %v976
        %v980 = vadd.f32 %v968, %v975
        %981 = vrot.lane.b32.xlu0 %v954, 17
        %v982 = vpop.permute.xlu0 %981
        %983 = vrot.lane.b32.xlu0 %v955, 17
        %v984 = vpop.permute.xlu0 %983
        %985 = vrot.lane.b32.xlu0 %v956, 17
        %v986 = vpop.permute.xlu0 %985
        %v987 = vsel %vm468, %v984, %v986
        %v988 = vsel %vm468, %v982, %v984
        %v989 = vsel %vm468, %v986, %v982
        %v990 = vadd.f32 %v978, %v989
        %v991 = vadd.f32 %v979, %v988
        %v992 = vadd.f32 %v980, %v987
        %993 = vrot.lane.b32.xlu0 %v954, 1
        %v994 = vpop.permute.xlu0 %993
        %995 = vrot.lane.b32.xlu0 %v955, 1
        %v996 = vpop.permute.xlu0 %995
        %997 = vrot.lane.b32.xlu0 %v956, 1
        %v998 = vpop.permute.xlu0 %997
        %v999 = vsel %vm537, %v996, %v998
        %v1000 = vsel %vm537, %v994, %v996
        %v1001 = vsel %vm537, %v998, %v994
        %v1002 = vadd.f32 %v990, %v1001
        %v1003 = vadd.f32 %v991, %v1000
        %v1004 = vadd.f32 %v992, %v999
        %1005 = vrot.lane.b32.xlu0 %v954, 127
        %v1006 = vpop.permute.xlu0 %1005
        %1007 = vrot.lane.b32.xlu0 %v955, 127
        %v1008 = vpop.permute.xlu0 %1007
        %1009 = vrot.lane.b32.xlu0 %v956, 127
        %v1010 = vpop.permute.xlu0 %1009
        %v1011 = vsel %vm665, %v1008, %v1010
        %v1012 = vsel %vm665, %v1006, %v1008
        %v1013 = vsel %vm665, %v1010, %v1006
        %v1014 = vadd.f32 %v1002, %v1012
        %v1015 = vadd.f32 %v1003, %v1011
        %v1016 = vadd.f32 %v1004, %v1013
        %1017 = vrot.lane.b32.xlu0 %v954, 111
        %v1018 = vpop.permute.xlu0 %1017
        %1019 = vrot.lane.b32.xlu0 %v955, 111
        %v1020 = vpop.permute.xlu0 %1019
        %1021 = vrot.lane.b32.xlu0 %v956, 111
        %v1022 = vpop.permute.xlu0 %1021
        %v1023 = vsel %vm734, %v1020, %v1022
        %v1024 = vsel %vm734, %v1018, %v1020
        %v1025 = vsel %vm734, %v1022, %v1018
        %v1026 = vadd.f32 %v1014, %v1024
        %v1027 = vadd.f32 %v1015, %v1023
        %v1028 = vadd.f32 %v1016, %v1025
        %1029 = vrot.lane.b32.xlu0 %v954, 110
        %v1030 = vpop.permute.xlu0 %1029
        %1031 = vrot.lane.b32.xlu0 %v955, 110
        %v1032 = vpop.permute.xlu0 %1031
        %1033 = vrot.lane.b32.xlu0 %v956, 110
        %v1034 = vpop.permute.xlu0 %1033
        %v1035 = vsel %vm803, %v1032, %v1034
        %v1036 = vsel %vm803, %v1030, %v1032
        %v1037 = vsel %vm803, %v1034, %v1030
        %v1038 = vadd.f32 %v1026, %v1036
        %v1039 = vadd.f32 %v1027, %v1035
        %v1040 = vadd.f32 %v1028, %v1037
        %1041 = vrot.lane.b32.xlu0 %v954, 109
        %v1042 = vpop.permute.xlu0 %1041
        %1043 = vrot.lane.b32.xlu0 %v955, 109
        %v1044 = vpop.permute.xlu0 %1043
        %1045 = vrot.lane.b32.xlu0 %v956, 109
        %v1046 = vpop.permute.xlu0 %1045
        %v1047 = vsel %vm872, %v1044, %v1046
        %v1048 = vsel %vm872, %v1042, %v1044
        %v1049 = vsel %vm872, %v1046, %v1042
        %v1050 = vadd.f32 %v1038, %v1048
        %v1051 = vadd.f32 %v1039, %v1047
        %v1052 = vadd.f32 %v1040, %v1049
        %v1054 = vperm.slane %v323, 0
        %v1055 = vperm.slane %v323, 1
        %v1056 = vperm.slane %v323, 2
        %v1060 = vmul.f32 %v1050, %v1054
        %v1061 = vmul.f32 %v1051, %v1055
        %v1062 = vmul.f32 %v1052, %v1056
        %1063 = vrot.lane.b32.xlu0 %v1060, 19
        %v1064 = vpop.permute.xlu0 %1063
        %1065 = vrot.lane.b32.xlu0 %v1061, 19
        %v1066 = vpop.permute.xlu0 %1065
        %1067 = vrot.lane.b32.xlu0 %v1062, 19
        %v1068 = vpop.permute.xlu0 %1067
        %v1069 = vsel %vm335, %v1066, %v1068
        %v1070 = vsel %vm335, %v1064, %v1066
        %v1071 = vsel %vm335, %v1068, %v1064
        %v1072 = vld [vmem:[%s6] sm:$0x3]
        %v1073 = vpack.c.bf16 %v1071, %v1071
        %v1074 = vpack.c.bf16 %v1070, %v1070
        %v1075 = vpack.c.bf16 %v1069, %v1069
        %1076 = vrot.lane.b32.xlu0 %v1060, 18
        %v1077 = vpop.permute.xlu0 %1076
        %1078 = vrot.lane.b32.xlu0 %v1061, 18
        %v1079 = vpop.permute.xlu0 %1078
        %1080 = vrot.lane.b32.xlu0 %v1062, 18
        %v1081 = vpop.permute.xlu0 %1080
        %v1082 = vsel %vm349, %v1079, %v1081
        %v1083 = vsel %vm349, %v1077, %v1079
        %v1084 = vsel %vm349, %v1081, %v1077
        %s1085 = scalar_lea.vmem %s6, 2
        %v1086 = vld [vmem:[%s1085] sm:$0x3]
        %v1087 = vpack.c.bf16 %v1084, %v1084
        %v1088 = vpack.c.bf16 %v1083, %v1083
        %v1089 = vpack.c.bf16 %v1082, %v1082
        %v1091 = vsel %vm358, %v1086, 0
        %v1094 = vsel %vm362, %v1087, 0
        %v1097 = vsel %vm362, %v1088, 0
        %v1100 = vsel %vm362, %v1089, 0
        %1102 = vmatpush.bf16.msra.mxu0 0
        %1103 = vmatpush.bf16.msra.mxu0 0
        %1104 = vmatpush.bf16.msra.mxu0 0
        %1105 = vmatpush.bf16.msra.mxu0 0
        %1106 = vmatpush.bf16.msra.mxu0 0
        %1107 = vmatpush.bf16.msra.mxu0 0
        %1108 = vmatpush.bf16.msra.mxu0 0
        %1109 = vmatpush.bf16.msra.mxu0 %v1094
        %1110 = vmatmul.bf16.gmra.mxu0 %v1091
        %v1111 = vpop.f32.mrf.mxu0
        %v1112 = vadd.f32 0.0, %v1111
        %v1113 = vpop.f32.mrf.mxu0
        %1114 = vdwg.mxu0
        %1115 = vmatpush.bf16.msra.mxu0 0
        %1116 = vmatpush.bf16.msra.mxu0 0
        %1117 = vmatpush.bf16.msra.mxu0 0
        %1118 = vmatpush.bf16.msra.mxu0 0
        %1119 = vmatpush.bf16.msra.mxu0 0
        %1120 = vmatpush.bf16.msra.mxu0 0
        %1121 = vmatpush.bf16.msra.mxu0 0
        %1122 = vmatpush.bf16.msra.mxu0 %v1097
        %1123 = vmatmul.bf16.gmra.mxu0 %v1091
        %v1124 = vpop.f32.mrf.mxu0
        %v1125 = vadd.f32 0.0, %v1124
        %v1126 = vpop.f32.mrf.mxu0
        %1127 = vdwg.mxu0
        %1128 = vmatpush.bf16.msra.mxu0 0
        %1129 = vmatpush.bf16.msra.mxu0 0
        %1130 = vmatpush.bf16.msra.mxu0 0
        %1131 = vmatpush.bf16.msra.mxu0 0
        %1132 = vmatpush.bf16.msra.mxu0 0
        %1133 = vmatpush.bf16.msra.mxu0 0
        %1134 = vmatpush.bf16.msra.mxu0 0
        %1135 = vmatpush.bf16.msra.mxu0 %v1100
        %1136 = vmatmul.bf16.gmra.mxu0 %v1091
        %v1137 = vpop.f32.mrf.mxu0
        %v1138 = vadd.f32 0.0, %v1137
        %v1139 = vpop.f32.mrf.mxu0
        %1140 = vdwg.mxu0
        %v1142 = vsel %vm358, %v1072, 0
        %v1145 = vsel %vm362, %v1073, 0
        %v1148 = vsel %vm362, %v1074, 0
        %v1151 = vsel %vm362, %v1075, 0
        %1153 = vmatpush.bf16.msra.mxu0 0
        %1154 = vmatpush.bf16.msra.mxu0 0
        %1155 = vmatpush.bf16.msra.mxu0 0
        %1156 = vmatpush.bf16.msra.mxu0 0
        %1157 = vmatpush.bf16.msra.mxu0 0
        %1158 = vmatpush.bf16.msra.mxu0 0
        %1159 = vmatpush.bf16.msra.mxu0 0
        %1160 = vmatpush.bf16.msra.mxu0 %v1145
        %1161 = vmatmul.bf16.gmra.mxu0 %v1142
        %v1162 = vpop.f32.mrf.mxu0
        %v1163 = vadd.f32 %v1112, %v1162
        %v1164 = vpop.f32.mrf.mxu0
        %1165 = vdwg.mxu0
        %1166 = vmatpush.bf16.msra.mxu0 0
        %1167 = vmatpush.bf16.msra.mxu0 0
        %1168 = vmatpush.bf16.msra.mxu0 0
        %1169 = vmatpush.bf16.msra.mxu0 0
        %1170 = vmatpush.bf16.msra.mxu0 0
        %1171 = vmatpush.bf16.msra.mxu0 0
        %1172 = vmatpush.bf16.msra.mxu0 0
        %1173 = vmatpush.bf16.msra.mxu0 %v1148
        %1174 = vmatmul.bf16.gmra.mxu0 %v1142
        %v1175 = vpop.f32.mrf.mxu0
        %v1176 = vadd.f32 %v1125, %v1175
        %v1177 = vpop.f32.mrf.mxu0
        %1178 = vdwg.mxu0
        %1179 = vmatpush.bf16.msra.mxu0 0
        %1180 = vmatpush.bf16.msra.mxu0 0
        %1181 = vmatpush.bf16.msra.mxu0 0
        %1182 = vmatpush.bf16.msra.mxu0 0
        %1183 = vmatpush.bf16.msra.mxu0 0
        %1184 = vmatpush.bf16.msra.mxu0 0
        %1185 = vmatpush.bf16.msra.mxu0 0
        %1186 = vmatpush.bf16.msra.mxu0 %v1151
        %1187 = vmatmul.bf16.gmra.mxu0 %v1142
        %v1188 = vpop.f32.mrf.mxu0
        %v1189 = vadd.f32 %v1138, %v1188
        %v1190 = vpop.f32.mrf.mxu0
        %1191 = vdwg.mxu0
        %1192 = vrot.lane.b32.xlu0 %v1060, 17
        %v1193 = vpop.permute.xlu0 %1192
        %1194 = vrot.lane.b32.xlu0 %v1061, 17
        %v1195 = vpop.permute.xlu0 %1194
        %1196 = vrot.lane.b32.xlu0 %v1062, 17
        %v1197 = vpop.permute.xlu0 %1196
        %v1198 = vsel %vm468, %v1195, %v1197
        %v1199 = vsel %vm468, %v1193, %v1195
        %v1200 = vsel %vm468, %v1197, %v1193
        %s1201 = scalar_lea.vmem %s6, 4
        %v1202 = vld [vmem:[%s1201] sm:$0x3]
        %v1203 = vpack.c.bf16 %v1200, %v1200
        %v1204 = vpack.c.bf16 %v1199, %v1199
        %v1205 = vpack.c.bf16 %v1198, %v1198
        %v1207 = vsel %vm358, %v1202, 0
        %v1210 = vsel %vm362, %v1203, 0
        %v1213 = vsel %vm362, %v1204, 0
        %v1216 = vsel %vm362, %v1205, 0
        %1218 = vmatpush.bf16.msra.mxu0 0
        %1219 = vmatpush.bf16.msra.mxu0 0
        %1220 = vmatpush.bf16.msra.mxu0 0
        %1221 = vmatpush.bf16.msra.mxu0 0
        %1222 = vmatpush.bf16.msra.mxu0 0
        %1223 = vmatpush.bf16.msra.mxu0 0
        %1224 = vmatpush.bf16.msra.mxu0 0
        %1225 = vmatpush.bf16.msra.mxu0 %v1210
        %1226 = vmatmul.bf16.gmra.mxu0 %v1207
        %v1227 = vpop.f32.mrf.mxu0
        %v1228 = vadd.f32 0.0, %v1227
        %v1229 = vpop.f32.mrf.mxu0
        %1230 = vdwg.mxu0
        %1231 = vmatpush.bf16.msra.mxu0 0
        %1232 = vmatpush.bf16.msra.mxu0 0
        %1233 = vmatpush.bf16.msra.mxu0 0
        %1234 = vmatpush.bf16.msra.mxu0 0
        %1235 = vmatpush.bf16.msra.mxu0 0
        %1236 = vmatpush.bf16.msra.mxu0 0
        %1237 = vmatpush.bf16.msra.mxu0 0
        %1238 = vmatpush.bf16.msra.mxu0 %v1213
        %1239 = vmatmul.bf16.gmra.mxu0 %v1207
        %v1240 = vpop.f32.mrf.mxu0
        %v1241 = vadd.f32 0.0, %v1240
        %v1242 = vpop.f32.mrf.mxu0
        %1243 = vdwg.mxu0
        %1244 = vmatpush.bf16.msra.mxu0 0
        %1245 = vmatpush.bf16.msra.mxu0 0
        %1246 = vmatpush.bf16.msra.mxu0 0
        %1247 = vmatpush.bf16.msra.mxu0 0
        %1248 = vmatpush.bf16.msra.mxu0 0
        %1249 = vmatpush.bf16.msra.mxu0 0
        %1250 = vmatpush.bf16.msra.mxu0 0
        %1251 = vmatpush.bf16.msra.mxu0 %v1216
        %1252 = vmatmul.bf16.gmra.mxu0 %v1207
        %v1253 = vpop.f32.mrf.mxu0
        %v1254 = vadd.f32 0.0, %v1253
        %v1255 = vpop.f32.mrf.mxu0
        %1256 = vdwg.mxu0
        %v1257 = vadd.f32 %v1163, %v1228
        %v1258 = vadd.f32 %v1176, %v1241
        %v1259 = vadd.f32 %v1189, %v1254
        %1260 = vrot.lane.b32.xlu0 %v1060, 1
        %v1261 = vpop.permute.xlu0 %1260
        %1262 = vrot.lane.b32.xlu0 %v1061, 1
        %v1263 = vpop.permute.xlu0 %1262
        %1264 = vrot.lane.b32.xlu0 %v1062, 1
        %v1265 = vpop.permute.xlu0 %1264
        %v1266 = vsel %vm537, %v1263, %v1265
        %v1267 = vsel %vm537, %v1261, %v1263
        %v1268 = vsel %vm537, %v1265, %v1261
        %s1269 = scalar_lea.vmem %s6, 6
        %v1270 = vld [vmem:[%s1269] sm:$0x3]
        %v1271 = vpack.c.bf16 %v1268, %v1268
        %v1272 = vpack.c.bf16 %v1267, %v1267
        %v1273 = vpack.c.bf16 %v1266, %v1266
        %v1275 = vsel %vm358, %v1270, 0
        %v1278 = vsel %vm362, %v1271, 0
        %v1281 = vsel %vm362, %v1272, 0
        %v1284 = vsel %vm362, %v1273, 0
        %1286 = vmatpush.bf16.msra.mxu0 0
        %1287 = vmatpush.bf16.msra.mxu0 0
        %1288 = vmatpush.bf16.msra.mxu0 0
        %1289 = vmatpush.bf16.msra.mxu0 0
        %1290 = vmatpush.bf16.msra.mxu0 0
        %1291 = vmatpush.bf16.msra.mxu0 0
        %1292 = vmatpush.bf16.msra.mxu0 0
        %1293 = vmatpush.bf16.msra.mxu0 %v1278
        %1294 = vmatmul.bf16.gmra.mxu0 %v1275
        %v1295 = vpop.f32.mrf.mxu0
        %v1296 = vadd.f32 0.0, %v1295
        %v1297 = vpop.f32.mrf.mxu0
        %1298 = vdwg.mxu0
        %1299 = vmatpush.bf16.msra.mxu0 0
        %1300 = vmatpush.bf16.msra.mxu0 0
        %1301 = vmatpush.bf16.msra.mxu0 0
        %1302 = vmatpush.bf16.msra.mxu0 0
        %1303 = vmatpush.bf16.msra.mxu0 0
        %1304 = vmatpush.bf16.msra.mxu0 0
        %1305 = vmatpush.bf16.msra.mxu0 0
        %1306 = vmatpush.bf16.msra.mxu0 %v1281
        %1307 = vmatmul.bf16.gmra.mxu0 %v1275
        %v1308 = vpop.f32.mrf.mxu0
        %v1309 = vadd.f32 0.0, %v1308
        %v1310 = vpop.f32.mrf.mxu0
        %1311 = vdwg.mxu0
        %1312 = vmatpush.bf16.msra.mxu0 0
        %1313 = vmatpush.bf16.msra.mxu0 0
        %1314 = vmatpush.bf16.msra.mxu0 0
        %1315 = vmatpush.bf16.msra.mxu0 0
        %1316 = vmatpush.bf16.msra.mxu0 0
        %1317 = vmatpush.bf16.msra.mxu0 0
        %1318 = vmatpush.bf16.msra.mxu0 0
        %1319 = vmatpush.bf16.msra.mxu0 %v1284
        %1320 = vmatmul.bf16.gmra.mxu0 %v1275
        %v1321 = vpop.f32.mrf.mxu0
        %v1322 = vadd.f32 0.0, %v1321
        %v1323 = vpop.f32.mrf.mxu0
        %1324 = vdwg.mxu0
        %v1325 = vadd.f32 %v1257, %v1296
        %v1326 = vadd.f32 %v1258, %v1309
        %v1327 = vadd.f32 %v1259, %v1322
        %s1328 = scalar_lea.vmem %s6, 8
        %v1329 = vld [vmem:[%s1328] sm:$0x3]
        %v1330 = vpack.c.bf16 %v1060, %v1060
        %v1331 = vpack.c.bf16 %v1061, %v1061
        %v1332 = vpack.c.bf16 %v1062, %v1062
        %v1334 = vsel %vm358, %v1329, 0
        %v1337 = vsel %vm362, %v1330, 0
        %v1340 = vsel %vm362, %v1331, 0
        %v1343 = vsel %vm362, %v1332, 0
        %1345 = vmatpush.bf16.msra.mxu0 0
        %1346 = vmatpush.bf16.msra.mxu0 0
        %1347 = vmatpush.bf16.msra.mxu0 0
        %1348 = vmatpush.bf16.msra.mxu0 0
        %1349 = vmatpush.bf16.msra.mxu0 0
        %1350 = vmatpush.bf16.msra.mxu0 0
        %1351 = vmatpush.bf16.msra.mxu0 0
        %1352 = vmatpush.bf16.msra.mxu0 %v1337
        %1353 = vmatmul.bf16.gmra.mxu0 %v1334
        %v1354 = vpop.f32.mrf.mxu0
        %v1355 = vadd.f32 0.0, %v1354
        %v1356 = vpop.f32.mrf.mxu0
        %1357 = vdwg.mxu0
        %1358 = vmatpush.bf16.msra.mxu0 0
        %1359 = vmatpush.bf16.msra.mxu0 0
        %1360 = vmatpush.bf16.msra.mxu0 0
        %1361 = vmatpush.bf16.msra.mxu0 0
        %1362 = vmatpush.bf16.msra.mxu0 0
        %1363 = vmatpush.bf16.msra.mxu0 0
        %1364 = vmatpush.bf16.msra.mxu0 0
        %1365 = vmatpush.bf16.msra.mxu0 %v1340
        %1366 = vmatmul.bf16.gmra.mxu0 %v1334
        %v1367 = vpop.f32.mrf.mxu0
        %v1368 = vadd.f32 0.0, %v1367
        %v1369 = vpop.f32.mrf.mxu0
        %1370 = vdwg.mxu0
        %1371 = vmatpush.bf16.msra.mxu0 0
        %1372 = vmatpush.bf16.msra.mxu0 0
        %1373 = vmatpush.bf16.msra.mxu0 0
        %1374 = vmatpush.bf16.msra.mxu0 0
        %1375 = vmatpush.bf16.msra.mxu0 0
        %1376 = vmatpush.bf16.msra.mxu0 0
        %1377 = vmatpush.bf16.msra.mxu0 0
        %1378 = vmatpush.bf16.msra.mxu0 %v1343
        %1379 = vmatmul.bf16.gmra.mxu0 %v1334
        %v1380 = vpop.f32.mrf.mxu0
        %v1381 = vadd.f32 0.0, %v1380
        %v1382 = vpop.f32.mrf.mxu0
        %1383 = vdwg.mxu0
        %v1384 = vadd.f32 %v1325, %v1355
        %v1385 = vadd.f32 %v1326, %v1368
        %v1386 = vadd.f32 %v1327, %v1381
        %1387 = vrot.lane.b32.xlu0 %v1060, 127
        %v1388 = vpop.permute.xlu0 %1387
        %1389 = vrot.lane.b32.xlu0 %v1061, 127
        %v1390 = vpop.permute.xlu0 %1389
        %1391 = vrot.lane.b32.xlu0 %v1062, 127
        %v1392 = vpop.permute.xlu0 %1391
        %v1393 = vsel %vm665, %v1390, %v1392
        %v1394 = vsel %vm665, %v1388, %v1390
        %v1395 = vsel %vm665, %v1392, %v1388
        %s1396 = scalar_lea.vmem %s6, 10
        %v1397 = vld [vmem:[%s1396] sm:$0x3]
        %v1398 = vpack.c.bf16 %v1394, %v1394
        %v1399 = vpack.c.bf16 %v1393, %v1393
        %v1400 = vpack.c.bf16 %v1395, %v1395
        %v1402 = vsel %vm358, %v1397, 0
        %v1405 = vsel %vm362, %v1398, 0
        %v1408 = vsel %vm362, %v1399, 0
        %v1411 = vsel %vm362, %v1400, 0
        %1413 = vmatpush.bf16.msra.mxu0 0
        %1414 = vmatpush.bf16.msra.mxu0 0
        %1415 = vmatpush.bf16.msra.mxu0 0
        %1416 = vmatpush.bf16.msra.mxu0 0
        %1417 = vmatpush.bf16.msra.mxu0 0
        %1418 = vmatpush.bf16.msra.mxu0 0
        %1419 = vmatpush.bf16.msra.mxu0 0
        %1420 = vmatpush.bf16.msra.mxu0 %v1405
        %1421 = vmatmul.bf16.gmra.mxu0 %v1402
        %v1422 = vpop.f32.mrf.mxu0
        %v1423 = vadd.f32 0.0, %v1422
        %v1424 = vpop.f32.mrf.mxu0
        %1425 = vdwg.mxu0
        %1426 = vmatpush.bf16.msra.mxu0 0
        %1427 = vmatpush.bf16.msra.mxu0 0
        %1428 = vmatpush.bf16.msra.mxu0 0
        %1429 = vmatpush.bf16.msra.mxu0 0
        %1430 = vmatpush.bf16.msra.mxu0 0
        %1431 = vmatpush.bf16.msra.mxu0 0
        %1432 = vmatpush.bf16.msra.mxu0 0
        %1433 = vmatpush.bf16.msra.mxu0 %v1408
        %1434 = vmatmul.bf16.gmra.mxu0 %v1402
        %v1435 = vpop.f32.mrf.mxu0
        %v1436 = vadd.f32 0.0, %v1435
        %v1437 = vpop.f32.mrf.mxu0
        %1438 = vdwg.mxu0
        %1439 = vmatpush.bf16.msra.mxu0 0
        %1440 = vmatpush.bf16.msra.mxu0 0
        %1441 = vmatpush.bf16.msra.mxu0 0
        %1442 = vmatpush.bf16.msra.mxu0 0
        %1443 = vmatpush.bf16.msra.mxu0 0
        %1444 = vmatpush.bf16.msra.mxu0 0
        %1445 = vmatpush.bf16.msra.mxu0 0
        %1446 = vmatpush.bf16.msra.mxu0 %v1411
        %1447 = vmatmul.bf16.gmra.mxu0 %v1402
        %v1448 = vpop.f32.mrf.mxu0
        %v1449 = vadd.f32 0.0, %v1448
        %v1450 = vpop.f32.mrf.mxu0
        %1451 = vdwg.mxu0
        %v1452 = vadd.f32 %v1384, %v1423
        %v1453 = vadd.f32 %v1385, %v1436
        %v1454 = vadd.f32 %v1386, %v1449
        %1455 = vrot.lane.b32.xlu0 %v1060, 111
        %v1456 = vpop.permute.xlu0 %1455
        %1457 = vrot.lane.b32.xlu0 %v1061, 111
        %v1458 = vpop.permute.xlu0 %1457
        %1459 = vrot.lane.b32.xlu0 %v1062, 111
        %v1460 = vpop.permute.xlu0 %1459
        %v1461 = vsel %vm734, %v1458, %v1460
        %v1462 = vsel %vm734, %v1456, %v1458
        %v1463 = vsel %vm734, %v1460, %v1456
        %s1464 = scalar_lea.vmem %s6, 12
        %v1465 = vld [vmem:[%s1464] sm:$0x3]
        %v1466 = vpack.c.bf16 %v1462, %v1462
        %v1467 = vpack.c.bf16 %v1461, %v1461
        %v1468 = vpack.c.bf16 %v1463, %v1463
        %v1470 = vsel %vm358, %v1465, 0
        %v1473 = vsel %vm362, %v1466, 0
        %v1476 = vsel %vm362, %v1467, 0
        %v1479 = vsel %vm362, %v1468, 0
        %1481 = vmatpush.bf16.msra.mxu0 0
        %1482 = vmatpush.bf16.msra.mxu0 0
        %1483 = vmatpush.bf16.msra.mxu0 0
        %1484 = vmatpush.bf16.msra.mxu0 0
        %1485 = vmatpush.bf16.msra.mxu0 0
        %1486 = vmatpush.bf16.msra.mxu0 0
        %1487 = vmatpush.bf16.msra.mxu0 0
        %1488 = vmatpush.bf16.msra.mxu0 %v1473
        %1489 = vmatmul.bf16.gmra.mxu0 %v1470
        %v1490 = vpop.f32.mrf.mxu0
        %v1491 = vadd.f32 0.0, %v1490
        %v1492 = vpop.f32.mrf.mxu0
        %1493 = vdwg.mxu0
        %1494 = vmatpush.bf16.msra.mxu0 0
        %1495 = vmatpush.bf16.msra.mxu0 0
        %1496 = vmatpush.bf16.msra.mxu0 0
        %1497 = vmatpush.bf16.msra.mxu0 0
        %1498 = vmatpush.bf16.msra.mxu0 0
        %1499 = vmatpush.bf16.msra.mxu0 0
        %1500 = vmatpush.bf16.msra.mxu0 0
        %1501 = vmatpush.bf16.msra.mxu0 %v1476
        %1502 = vmatmul.bf16.gmra.mxu0 %v1470
        %v1503 = vpop.f32.mrf.mxu0
        %v1504 = vadd.f32 0.0, %v1503
        %v1505 = vpop.f32.mrf.mxu0
        %1506 = vdwg.mxu0
        %1507 = vmatpush.bf16.msra.mxu0 0
        %1508 = vmatpush.bf16.msra.mxu0 0
        %1509 = vmatpush.bf16.msra.mxu0 0
        %1510 = vmatpush.bf16.msra.mxu0 0
        %1511 = vmatpush.bf16.msra.mxu0 0
        %1512 = vmatpush.bf16.msra.mxu0 0
        %1513 = vmatpush.bf16.msra.mxu0 0
        %1514 = vmatpush.bf16.msra.mxu0 %v1479
        %1515 = vmatmul.bf16.gmra.mxu0 %v1470
        %v1516 = vpop.f32.mrf.mxu0
        %v1517 = vadd.f32 0.0, %v1516
        %v1518 = vpop.f32.mrf.mxu0
        %1519 = vdwg.mxu0
        %v1520 = vadd.f32 %v1452, %v1491
        %v1521 = vadd.f32 %v1453, %v1504
        %v1522 = vadd.f32 %v1454, %v1517
        %1523 = vrot.lane.b32.xlu0 %v1060, 110
        %v1524 = vpop.permute.xlu0 %1523
        %1525 = vrot.lane.b32.xlu0 %v1061, 110
        %v1526 = vpop.permute.xlu0 %1525
        %1527 = vrot.lane.b32.xlu0 %v1062, 110
        %v1528 = vpop.permute.xlu0 %1527
        %v1529 = vsel %vm803, %v1526, %v1528
        %v1530 = vsel %vm803, %v1524, %v1526
        %v1531 = vsel %vm803, %v1528, %v1524
        %s1532 = scalar_lea.vmem %s6, 14
        %v1533 = vld [vmem:[%s1532] sm:$0x3]
        %v1534 = vpack.c.bf16 %v1530, %v1530
        %v1535 = vpack.c.bf16 %v1529, %v1529
        %v1536 = vpack.c.bf16 %v1531, %v1531
        %v1538 = vsel %vm358, %v1533, 0
        %v1541 = vsel %vm362, %v1534, 0
        %v1544 = vsel %vm362, %v1535, 0
        %v1547 = vsel %vm362, %v1536, 0
        %1549 = vmatpush.bf16.msra.mxu0 0
        %1550 = vmatpush.bf16.msra.mxu0 0
        %1551 = vmatpush.bf16.msra.mxu0 0
        %1552 = vmatpush.bf16.msra.mxu0 0
        %1553 = vmatpush.bf16.msra.mxu0 0
        %1554 = vmatpush.bf16.msra.mxu0 0
        %1555 = vmatpush.bf16.msra.mxu0 0
        %1556 = vmatpush.bf16.msra.mxu0 %v1541
        %1557 = vmatmul.bf16.gmra.mxu0 %v1538
        %v1558 = vpop.f32.mrf.mxu0
        %v1559 = vadd.f32 0.0, %v1558
        %v1560 = vpop.f32.mrf.mxu0
        %1561 = vdwg.mxu0
        %1562 = vmatpush.bf16.msra.mxu0 0
        %1563 = vmatpush.bf16.msra.mxu0 0
        %1564 = vmatpush.bf16.msra.mxu0 0
        %1565 = vmatpush.bf16.msra.mxu0 0
        %1566 = vmatpush.bf16.msra.mxu0 0
        %1567 = vmatpush.bf16.msra.mxu0 0
        %1568 = vmatpush.bf16.msra.mxu0 0
        %1569 = vmatpush.bf16.msra.mxu0 %v1544
        %1570 = vmatmul.bf16.gmra.mxu0 %v1538
        %v1571 = vpop.f32.mrf.mxu0
        %v1572 = vadd.f32 0.0, %v1571
        %v1573 = vpop.f32.mrf.mxu0
        %1574 = vdwg.mxu0
        %1575 = vmatpush.bf16.msra.mxu0 0
        %1576 = vmatpush.bf16.msra.mxu0 0
        %1577 = vmatpush.bf16.msra.mxu0 0
        %1578 = vmatpush.bf16.msra.mxu0 0
        %1579 = vmatpush.bf16.msra.mxu0 0
        %1580 = vmatpush.bf16.msra.mxu0 0
        %1581 = vmatpush.bf16.msra.mxu0 0
        %1582 = vmatpush.bf16.msra.mxu0 %v1547
        %1583 = vmatmul.bf16.gmra.mxu0 %v1538
        %v1584 = vpop.f32.mrf.mxu0
        %v1585 = vadd.f32 0.0, %v1584
        %v1586 = vpop.f32.mrf.mxu0
        %1587 = vdwg.mxu0
        %v1588 = vadd.f32 %v1520, %v1559
        %v1589 = vadd.f32 %v1521, %v1572
        %v1590 = vadd.f32 %v1522, %v1585
        %1591 = vrot.lane.b32.xlu0 %v1060, 109
        %v1592 = vpop.permute.xlu0 %1591
        %1593 = vrot.lane.b32.xlu0 %v1061, 109
        %v1594 = vpop.permute.xlu0 %1593
        %1595 = vrot.lane.b32.xlu0 %v1062, 109
        %v1596 = vpop.permute.xlu0 %1595
        %v1597 = vsel %vm872, %v1594, %v1596
        %v1598 = vsel %vm872, %v1592, %v1594
        %v1599 = vsel %vm872, %v1596, %v1592
        %s1600 = scalar_lea.vmem %s6, 16
        %v1601 = vld [vmem:[%s1600] sm:$0x3]
        %v1602 = vpack.c.bf16 %v1598, %v1598
        %v1603 = vpack.c.bf16 %v1597, %v1597
        %v1604 = vpack.c.bf16 %v1599, %v1599
        %v1606 = vsel %vm358, %v1601, 0
        %v1609 = vsel %vm362, %v1602, 0
        %v1612 = vsel %vm362, %v1603, 0
        %v1615 = vsel %vm362, %v1604, 0
        %1617 = vmatpush.bf16.msra.mxu0 0
        %1618 = vmatpush.bf16.msra.mxu0 0
        %1619 = vmatpush.bf16.msra.mxu0 0
        %1620 = vmatpush.bf16.msra.mxu0 0
        %1621 = vmatpush.bf16.msra.mxu0 0
        %1622 = vmatpush.bf16.msra.mxu0 0
        %1623 = vmatpush.bf16.msra.mxu0 0
        %1624 = vmatpush.bf16.msra.mxu0 %v1609
        %1625 = vmatmul.bf16.gmra.mxu0 %v1606
        %v1626 = vpop.f32.mrf.mxu0
        %v1627 = vadd.f32 0.0, %v1626
        %v1628 = vpop.f32.mrf.mxu0
        %1629 = vdwg.mxu0
        %1630 = vmatpush.bf16.msra.mxu0 0
        %1631 = vmatpush.bf16.msra.mxu0 0
        %1632 = vmatpush.bf16.msra.mxu0 0
        %1633 = vmatpush.bf16.msra.mxu0 0
        %1634 = vmatpush.bf16.msra.mxu0 0
        %1635 = vmatpush.bf16.msra.mxu0 0
        %1636 = vmatpush.bf16.msra.mxu0 0
        %1637 = vmatpush.bf16.msra.mxu0 %v1612
        %1638 = vmatmul.bf16.gmra.mxu0 %v1606
        %v1639 = vpop.f32.mrf.mxu0
        %v1640 = vadd.f32 0.0, %v1639
        %v1641 = vpop.f32.mrf.mxu0
        %1642 = vdwg.mxu0
        %1643 = vmatpush.bf16.msra.mxu0 0
        %1644 = vmatpush.bf16.msra.mxu0 0
        %1645 = vmatpush.bf16.msra.mxu0 0
        %1646 = vmatpush.bf16.msra.mxu0 0
        %1647 = vmatpush.bf16.msra.mxu0 0
        %1648 = vmatpush.bf16.msra.mxu0 0
        %1649 = vmatpush.bf16.msra.mxu0 0
        %1650 = vmatpush.bf16.msra.mxu0 %v1615
        %1651 = vmatmul.bf16.gmra.mxu0 %v1606
        %v1652 = vpop.f32.mrf.mxu0
        %v1653 = vadd.f32 0.0, %v1652
        %v1654 = vpop.f32.mrf.mxu0
        %1655 = vdwg.mxu0
        %v1656 = vadd.f32 %v1588, %v1627
        %v1657 = vadd.f32 %v1589, %v1640
        %v1658 = vadd.f32 %v1590, %v1653
        %v1659 = vld [vmem:[%s7] sm:$0xf]
        %1661 = vset.pattern.permute.xlu0 0
        %1662 = vperm.xlu0 %1661, %v1659
        %v1663 = vpop.permute.xlu0 %1662
        %v1665 = vadd.f32 %v1656, %v1663
        %v1666 = vadd.f32 %v1657, %v1663
        %v1667 = vadd.f32 %v1658, %v1663
        %v1668 = vpack.c.bf16 %v1665, %v1665
        %v1669 = vpack.c.bf16 %v1666, %v1666
        %v1670 = vpack.c.bf16 %v1667, %v1667
        %v1671 = vld [vmem:[#allocation2] sm:$0xf]
        %v1672 = vld [vmem:[#allocation2 + $0x4] sm:$0xf]
        %v1673 = vld [vmem:[#allocation2 + $0x8] sm:$0xf]
        %v1674 = vld [vmem:[#allocation2 + $0xc] sm:$0xf]
        %v1675 = vld [vmem:[#allocation2 + $0x10] sm:$0xf]
        %v1676 = vld [vmem:[#allocation2 + $0x14] sm:$0xf]
        %v1677 = vld [vmem:[#allocation2 + $0x18] sm:$0xf]
        %v1678 = vld [vmem:[#allocation2 + $0x1c] sm:$0xf]
        %v1679 = vld [vmem:[#allocation2 + $0x20] sm:$0xf]
        %v1680 = vld [vmem:[#allocation2 + $0x24] sm:$0xf]
        %v1681 = vld [vmem:[#allocation2 + $0x28] sm:$0xf]
        %v1682 = vld [vmem:[#allocation2 + $0x2c] sm:$0xf]
        %v1683 = vld [vmem:[#allocation2 + $0x30] sm:$0xf]
        %v1684 = vld [vmem:[#allocation2 + $0x34] sm:$0xf]
        %v1685 = vld [vmem:[#allocation2 + $0x38] sm:$0xf]
        %v1686 = vld [vmem:[#allocation2 + $0x3c] sm:$0xf]
        %v1687 = vld [vmem:[#allocation2 + $0x40] sm:$0xf]
        %v1688 = vld [vmem:[#allocation2 + $0x44] sm:$0xf]
        %v1689 = vld [vmem:[#allocation2 + $0x48] sm:$0xf]
        %v1690 = vld [vmem:[#allocation2 + $0x4c] sm:$0xf]
        %v1691 = vld [vmem:[#allocation2 + $0x50] sm:$0xf]
        %v1692 = vld [vmem:[#allocation2 + $0x54] sm:$0xf]
        %v1693 = vld [vmem:[#allocation2 + $0x58] sm:$0xf]
        %v1694 = vld [vmem:[#allocation2 + $0x5c] sm:$0xf]
        %v1695 = vld [vmem:[#allocation2 + $0x60] sm:$0xf]
        %v1696 = vld [vmem:[#allocation2 + $0x64] sm:$0xf]
        %v1697 = vld [vmem:[#allocation2 + $0x68] sm:$0xf]
        %v1698 = vld [vmem:[#allocation2 + $0x6c] sm:$0xf]
        %v1699 = vld [vmem:[#allocation2 + $0x70] sm:$0xf]
        %v1700 = vld [vmem:[#allocation2 + $0x74] sm:$0xf]
        %v1701 = vld [vmem:[#allocation2 + $0x78] sm:$0xf]
        %v1702 = vld [vmem:[#allocation2 + $0x7c] sm:$0xf]
        %v1703 = vld [vmem:[#allocation2 + $0x80] sm:$0xf]
        %v1704 = vld [vmem:[#allocation2 + $0x84] sm:$0xf]
        %v1705 = vld [vmem:[#allocation2 + $0x88] sm:$0xf]
        %v1706 = vld [vmem:[#allocation2 + $0x8c] sm:$0xf]
        %v1707 = vld [vmem:[#allocation2 + $0x90] sm:$0xf]
        %v1708 = vld [vmem:[#allocation2 + $0x94] sm:$0xf]
        %v1709 = vld [vmem:[#allocation2 + $0x98] sm:$0xf]
        %v1710 = vld [vmem:[#allocation2 + $0x9c] sm:$0xf]
        %v1711 = vld [vmem:[#allocation2 + $0xa0] sm:$0xf]
        %v1712 = vld [vmem:[#allocation2 + $0xa4] sm:$0xf]
        %v1713 = vld [vmem:[#allocation2 + $0xa8] sm:$0xf]
        %v1714 = vld [vmem:[#allocation2 + $0xac] sm:$0xf]
        %v1715 = vld [vmem:[#allocation2 + $0xb0] sm:$0xf]
        %v1716 = vld [vmem:[#allocation2 + $0xb4] sm:$0xf]
        %v1717 = vld [vmem:[#allocation2 + $0xb8] sm:$0xf]
        %v1718 = vld [vmem:[#allocation2 + $0xbc] sm:$0xf]
        %v1767 = vunpack.c.l.b16 %v1671
        %v1768 = vunpack.c.l.b16 %v1672
        %v1769 = vunpack.c.l.b16 %v1673
        %v1770 = vunpack.c.l.b16 %v1674
        %v1771 = vunpack.c.l.b16 %v1675
        %v1772 = vunpack.c.l.b16 %v1676
        %v1773 = vunpack.c.l.b16 %v1677
        %v1774 = vunpack.c.l.b16 %v1678
        %v1775 = vunpack.c.l.b16 %v1679
        %v1776 = vunpack.c.l.b16 %v1680
        %v1777 = vunpack.c.l.b16 %v1681
        %v1778 = vunpack.c.l.b16 %v1682
        %v1779 = vunpack.c.l.b16 %v1683
        %v1780 = vunpack.c.l.b16 %v1684
        %v1781 = vunpack.c.l.b16 %v1685
        %v1782 = vunpack.c.l.b16 %v1686
        %v1783 = vunpack.c.l.b16 %v1687
        %v1784 = vunpack.c.l.b16 %v1688
        %v1785 = vunpack.c.l.b16 %v1689
        %v1786 = vunpack.c.l.b16 %v1690
        %v1787 = vunpack.c.l.b16 %v1691
        %v1788 = vunpack.c.l.b16 %v1692
        %v1789 = vunpack.c.l.b16 %v1693
        %v1790 = vunpack.c.l.b16 %v1694
        %v1791 = vunpack.c.l.b16 %v1695
        %v1792 = vunpack.c.l.b16 %v1696
        %v1793 = vunpack.c.l.b16 %v1697
        %v1794 = vunpack.c.l.b16 %v1698
        %v1795 = vunpack.c.l.b16 %v1699
        %v1796 = vunpack.c.l.b16 %v1700
        %v1797 = vunpack.c.l.b16 %v1701
        %v1798 = vunpack.c.l.b16 %v1702
        %v1799 = vunpack.c.l.b16 %v1703
        %v1800 = vunpack.c.l.b16 %v1704
        %v1801 = vunpack.c.l.b16 %v1705
        %v1802 = vunpack.c.l.b16 %v1706
        %v1803 = vunpack.c.l.b16 %v1707
        %v1804 = vunpack.c.l.b16 %v1708
        %v1805 = vunpack.c.l.b16 %v1709
        %v1806 = vunpack.c.l.b16 %v1710
        %v1807 = vunpack.c.l.b16 %v1711
        %v1808 = vunpack.c.l.b16 %v1712
        %v1809 = vunpack.c.l.b16 %v1713
        %v1810 = vunpack.c.l.b16 %v1714
        %v1811 = vunpack.c.l.b16 %v1715
        %v1812 = vunpack.c.l.b16 %v1716
        %v1813 = vunpack.c.l.b16 %v1717
        %v1814 = vunpack.c.l.b16 %v1718
        %v1815 = vpack.c.b16 %v1768, %v1767
        %v1816 = vpack.c.b16 %v1770, %v1769
        %v1817 = vpack.c.b16 %v1772, %v1771
        %v1818 = vpack.c.b16 %v1774, %v1773
        %v1819 = vpack.c.b16 %v1776, %v1775
        %v1820 = vpack.c.b16 %v1778, %v1777
        %v1821 = vpack.c.b16 %v1780, %v1779
        %v1822 = vpack.c.b16 %v1782, %v1781
        %v1823 = vpack.c.b16 %v1784, %v1783
        %v1824 = vpack.c.b16 %v1786, %v1785
        %v1825 = vpack.c.b16 %v1788, %v1787
        %v1826 = vpack.c.b16 %v1790, %v1789
        %v1827 = vpack.c.b16 %v1792, %v1791
        %v1828 = vpack.c.b16 %v1794, %v1793
        %v1829 = vpack.c.b16 %v1796, %v1795
        %v1830 = vpack.c.b16 %v1798, %v1797
        %v1831 = vpack.c.b16 %v1800, %v1799
        %v1832 = vpack.c.b16 %v1802, %v1801
        %v1833 = vpack.c.b16 %v1804, %v1803
        %v1834 = vpack.c.b16 %v1806, %v1805
        %v1835 = vpack.c.b16 %v1808, %v1807
        %v1836 = vpack.c.b16 %v1810, %v1809
        %v1837 = vpack.c.b16 %v1812, %v1811
        %v1838 = vpack.c.b16 %v1814, %v1813
        %1863 = vmatpush.bf16.msra.mxu0 %v1822
        %1864 = vmatpush.bf16.msra.mxu0 %v1821
        %1865 = vmatpush.bf16.msra.mxu0 %v1820
        %1866 = vmatpush.bf16.msra.mxu0 %v1819
        %1867 = vmatpush.bf16.msra.mxu0 %v1818
        %1868 = vmatpush.bf16.msra.mxu0 %v1817
        %1869 = vmatpush.bf16.msra.mxu0 %v1816
        %1870 = vmatpush.bf16.msra.mxu0 %v1815
        %1871 = vmatmul.bf16.gmra.mxu0 %v1668
        %v1872 = vpop.f32.mrf.mxu0
        %v1873 = vadd.f32 0.0, %v1872
        %v1874 = vpop.f32.mrf.mxu0
        %1875 = vdwg.mxu0
        %1876 = vmatpush.bf16.msra.mxu0 %v1830
        %1877 = vmatpush.bf16.msra.mxu0 %v1829
        %1878 = vmatpush.bf16.msra.mxu0 %v1828
        %1879 = vmatpush.bf16.msra.mxu0 %v1827
        %1880 = vmatpush.bf16.msra.mxu0 %v1826
        %1881 = vmatpush.bf16.msra.mxu0 %v1825
        %1882 = vmatpush.bf16.msra.mxu0 %v1824
        %1883 = vmatpush.bf16.msra.mxu0 %v1823
        %1884 = vmatmul.bf16.gmra.mxu0 %v1669
        %v1885 = vpop.f32.mrf.mxu0
        %v1886 = vadd.f32 %v1873, %v1885
        %v1887 = vpop.f32.mrf.mxu0
        %1888 = vdwg.mxu0
        %1889 = vmatpush.bf16.msra.mxu0 %v1838
        %1890 = vmatpush.bf16.msra.mxu0 %v1837
        %1891 = vmatpush.bf16.msra.mxu0 %v1836
        %1892 = vmatpush.bf16.msra.mxu0 %v1835
        %1893 = vmatpush.bf16.msra.mxu0 %v1834
        %1894 = vmatpush.bf16.msra.mxu0 %v1833
        %1895 = vmatpush.bf16.msra.mxu0 %v1832
        %1896 = vmatpush.bf16.msra.mxu0 %v1831
        %1897 = vmatmul.bf16.gmra.mxu0 %v1670
        %v1898 = vpop.f32.mrf.mxu0
        %v1899 = vadd.f32 %v1886, %v1898
        %v1900 = vpop.f32.mrf.mxu0
        %1901 = vdwg.mxu0
        %v1902 = vtanh.pop %v1899
        %v1903 = vmul.f32 %v1902, 2.0
        %1904 = vst [vmem:[%s315] sm:$0xf] %v1903
        %s1905 = sand.u32 %s204, 1
        %s1906 = scalar_lea.sflag [#allocation4], %s1905
        %s1907 = sand.u32 %s204, 1
        %s1908 = smul.addr %s1907, 4
        %s1909 = scalar_lea.vmem [#allocation5], %s1908
        // Predicated region
        $region57: #{tpu_custom_call.1} parent=51 // pred_check
          %p1910 = pneg %p214
        $region58: #{tpu_custom_call.1} parent=51 // pred_check_branch
          %1912 = sbr.rel (%p1910) target = $region60
        $region59: #{tpu_custom_call.1} parent=51 // pred_region
          %1914 = vsyncadd %s1906, 0
          %s1915 = smul.addr %s23, 4
          %s1916 = scalar_lea.hbm %s8, %s1915
          %s1918 = sshll.u32 %s1909, 4
          %s1919 = int_to_ptr.vmem [resolvable:$true] %s1918
          %s1920 = sshll.u32 %s1916, 4
          %s1921 = int_to_ptr.hbm [resolvable:$true] %s1920
          %1923 = dma.vmem_to_hbm [thread:$0]  %s1919, 64, %s1921, %s1906
        $region60: #{tpu_custom_call.1} parent=51 // pred_fallthru
          _
      $region52: #{tpu_custom_call.1} parent=5 // pred_fallthru
        _
      %p1924 = scmp.le.s32.totalorder 2, %s18
      // Predicated region
      $region61: #{tpu_custom_call.1} parent=5 // pred_check
        %p1925 = pneg %p1924
      $region62: #{tpu_custom_call.1} parent=5 // pred_check_branch
        %1927 = sbr.rel (%p1925) target = $region64
      $region63: #{tpu_custom_call.1} parent=5 // pred_region
        %s1928 = ssub.s32 %s18, 2
        // Predicated region
        $region65: #{tpu_custom_call.1} parent=63 // pred_check
          %p1929 = pneg %p220
        $region66: #{tpu_custom_call.1} parent=63 // pred_check_branch
          %1931 = sbr.rel (%p1929) target = $region68
        $region67: #{tpu_custom_call.1} parent=63 // pred_region
          %s1932 = sand.u32 %s205, 1
          %s1933 = scalar_lea.sflag [#allocation4], %s1932
          %s1934 = sand.u32 %s205, 1
          %s1935 = smul.addr %s1934, 4
          %s1936 = scalar_lea.vmem [#allocation5], %s1935
          %1938 = dma.done %s1933, 64
        $region68: #{tpu_custom_call.1} parent=63 // pred_fallthru
          _
      $region64: #{tpu_custom_call.1} parent=5 // pred_fallthru
        _
    $region6: #{tpu_custom_call.1} parent=1 // loop_footer
      %s22 = sadd.s32 1, %s18
    $region7: #{tpu_custom_call.1} parent=1 // loop_footer_branch
      %17 = sbr.rel target = $region3
    $region8: #{tpu_custom_call.1} parent=1 // loop_exit
      _
    %1939 = vsyncpa [#allocation3], 1
    %s1940 = scalar_lea.sflag [#allocation3], 1
    %1941 = vsyncpa %s1940, 1
    %1942 = vsyncpa [#allocation4], 1
    %s1943 = scalar_lea.sflag [#allocation4], 1
    %1944 = vsyncpa %s1943, 1

</llo_original>
